<compile_context>
chip_gen: v7x
topology: tpu7x:2x2x1
jax: 0.10.0
libtpu: 0.0.40
codegen_flags: <defaults>
</compile_context>

<pallas_src>
import numpy as np
import jax
import jax.numpy as jnp
from jax.experimental import pallas as pl
from jax.experimental.pallas import tpu as pltpu

EPS = 1e-5      # PyTorch BatchNorm2d default eps
GUARD = 128     # zero guard (lanes) around the flattened padded image


def _round_up(x, m):
    return (x + m - 1) // m * m


def residual_block_pallas(x_nchw, params):
    """Fused ResidualBlock forward (training-mode BatchNorm) as one Pallas kernel."""
    (w1, b1, g1, be1, w2, b2, g2, be2, wsk, gsk, besk) = params
    # b1/b2 (conv biases) shift the batch mean by the same per-channel constant and
    # therefore cancel exactly under training-mode BatchNorm -> folded away (not
    # shipped to the kernel).

    f32 = jnp.float32
    N, Cin, H, W = x_nchw.shape
    Cout = w1.shape[0]
    Hp, Wp = H + 2, W + 2
    Ppad = N * Hp * Wp                      # padded spatial domain, flattened
    PL = _round_up(Ppad, 128)               # lane-aligned compute width
    G = GUARD
    L = G + PL + G                          # guarded flat buffer length (lane axis)
    n_interior = N * H * W                  # pixels feeding the BN statistics
    Cin_p = _round_up(Cin, 8)               # sublane-tile aligned channel counts
    Cout_p = _round_up(Cout, 8)

    # ---------------- wrapper-side packing (plain XLA, cheap) ----------------
    # activations: NCHW -> (C, N, Hp, Wp) -> (C, Ppad) -> zero-guarded (C, L)
    xt = jnp.transpose(x_nchw.astype(f32), (1, 0, 2, 3))
    xt = jnp.pad(xt, ((0, Cin_p - Cin), (0, 0), (1, 1), (1, 1)))
    xf = jnp.pad(xt.reshape(Cin_p, Ppad), ((0, 0), (G, L - G - Ppad)))

    # interior-pixel mask over the (lane-padded) padded spatial domain
    mask = jnp.pad(jnp.ones((N, H, W), f32), ((0, 0), (1, 1), (1, 1))).reshape(1, Ppad)
    mask = jnp.pad(mask, ((0, 0), (0, PL - Ppad)))

    def pack3x3(wt):
        # PyTorch (Cout, Cin, 3, 3) -> (Cout_p, 9*Cin_p); column = tap*Cin_p + cin,
        # matching the tap-major im2col row order built inside the kernel.
        co, ci = wt.shape[0], wt.shape[1]
        co_p, ci_p = _round_up(co, 8), _round_up(ci, 8)
        wt = jnp.pad(wt.astype(f32), ((0, co_p - co), (0, ci_p - ci), (0, 0), (0, 0)))
        return jnp.transpose(wt, (0, 2, 3, 1)).reshape(co_p, 9 * ci_p)

    w1_p = pack3x3(w1)                                           # (Cout_p, 9*Cin_p)
    w2_p = pack3x3(w2)                                           # (Cout_p, 9*Cout_p)
    wsk_p = jnp.pad(wsk[:, :, 0, 0].astype(f32),
                    ((0, Cout_p - Cout), (0, Cin_p - Cin)))      # (Cout_p, Cin_p)

    def col(v, fill=0.0):
        return jnp.pad(v.astype(f32), (0, Cout_p - Cout),
                       constant_values=fill).reshape(Cout_p, 1)

    g1c, be1c = col(g1, 1.0), col(be1)
    g2c, be2c = col(g2, 1.0), col(be2)
    gskc, beskc = col(gsk, 1.0), col(besk)

    inv_n = 1.0 / n_interior
    # lane offset of tap (ky, kx) inside the guarded flat buffer
    tap_offsets = [G + (ky - 1) * Wp + (kx - 1) for ky in range(3) for kx in range(3)]

    # ---------------- the fused kernel ----------------
    def kernel(xf_ref, m_ref, w1_ref, g1_ref, be1_ref, w2_ref, g2_ref, be2_ref,
               wsk_ref, gsk_ref, besk_ref, o_ref, y1f_ref):
        m = m_ref[...]                                   # (1, PL) interior mask

        def im2col(src_ref):
            # 9 static lane-shifted views of the guarded flat buffer, stacked on the
            # contraction (sublane) axis -> one (9*C, PL) patch matrix per conv.
            return jnp.concatenate(
                [src_ref[:, off:off + PL] for off in tap_offsets], axis=0)

        def bn(z, gamma, beta, relu):
            # Training-mode BatchNorm: single pass (masked sum & sum-of-squares over
            # interior pixels) folded into one scale/shift FMA.  The conv bias shifts
            # the batch mean by the same constant and cancels exactly, so it is omitted.
            zm = z * m
            s = jnp.sum(zm, axis=1, keepdims=True)
            ss = jnp.sum(zm * zm, axis=1, keepdims=True)
            mean = s * inv_n
            var = ss * inv_n - mean * mean
            scale = gamma * jax.lax.rsqrt(var + EPS)
            shift = beta - mean * scale
            y = z * scale + shift
            return jnp.maximum(y, 0.0) if relu else y

        # conv1 (3x3) as one (Cout_p, 9*Cin_p) @ (9*Cin_p, PL) matmul -> bn1 -> relu.
        # (cast both dot operands to bf16 here for ~2x MXU throughput on v6e/v7x;
        #  kept f32 so the check against the f32 reference stays tight)
        p1 = im2col(xf_ref)
        y1 = bn(jnp.dot(w1_ref[...], p1, preferred_element_type=jnp.float32),
                g1_ref[...], be1_ref[...], relu=True) * m   # re-zero halo for conv2

        # stage y1 into the guarded flat scratch: zero only the guards + one
        # lane-aligned bulk store (no full re-zero of the buffer).
        y1f_ref[:, 0:G] = jnp.zeros((Cout_p, G), jnp.float32)
        y1f_ref[:, G + PL:L] = jnp.zeros((Cout_p, L - G - PL), jnp.float32)
        y1f_ref[:, G:G + PL] = y1

        # conv2 (3x3, fused-K im2col matmul) -> bn2
        y2 = bn(jnp.dot(w2_ref[...], im2col(y1f_ref),
                        preferred_element_type=jnp.float32),
                g2_ref[...], be2_ref[...], relu=False)

        # skip connection: 1x1 conv -> bn (the centre tap of the guarded input IS x)
        xc = xf_ref[:, G:G + PL]
        sk = bn(jnp.dot(wsk_ref[...], xc, preferred_element_type=jnp.float32),
                gsk_ref[...], besk_ref[...], relu=False)

        o_ref[...] = jnp.maximum(y2 + sk, 0.0)

    vmem = pl.BlockSpec(memory_space=pltpu.MemorySpace.VMEM)
    args = (xf, mask, w1_p, g1c, be1c, w2_p, g2c, be2c, wsk_p, gskc, beskc)
    out = pl.pallas_call(
        kernel,
        out_shape=jax.ShapeDtypeStruct((Cout_p, PL), jnp.float32),
        in_specs=[vmem] * len(args),
        out_specs=vmem,
        scratch_shapes=[pltpu.VMEM((Cout_p, L), jnp.float32)],
    )(*args)

    # (Cout_p, PL) -> NCHW: drop channel/lane padding and the 1-pixel halo
    out = out[:Cout, :Ppad].reshape(Cout, N, Hp, Wp)[:, :, 1:H + 1, 1:W + 1]
    return jnp.transpose(out, (1, 0, 2, 3))


def residual_block_ref(x_nchw, params):
    # pure-JAX reference (mirrors PyTorch training-mode forward)
    w1, b1, g1, be1, w2, b2, g2, be2, wsk, gsk, besk = params
    x = jnp.transpose(x_nchw, (0, 2, 3, 1))

    def conv(x, w, b=None):
        w_hwio = jnp.transpose(w, (2, 3, 1, 0))
        y = jax.lax.conv_general_dilated(
            x, w_hwio, window_strides=(1, 1), padding="SAME",
            dimension_numbers=("NHWC", "HWIO", "NHWC"))
        return y if b is None else y + b

    def bn(x, g, bt):
        mean = jnp.mean(x, axis=(0, 1, 2))
        var = jnp.mean((x - mean) ** 2, axis=(0, 1, 2))
        return (x - mean) * jax.lax.rsqrt(var + EPS) * g + bt

    y = jax.nn.relu(bn(conv(x, w1, b1), g1, be1))
    y = bn(conv(y, w2, b2), g2, be2)
    sk = bn(conv(x, wsk), gsk, besk)
    return jnp.transpose(jax.nn.relu(y + sk), (0, 3, 1, 2))


if __name__ == "__main__":
    N, Cin, Cout, H, W = 2, 4, 8, 16, 16  # stride=1, in!=out -> skip has 1x1 conv+BN
    key = jax.random.PRNGKey(0)
    ks = jax.random.split(key, 12)

    x = jax.random.normal(ks[0], (N, Cin, H, W), jnp.float32)
    w1 = 0.1 * jax.random.normal(ks[1], (Cout, Cin, 3, 3), jnp.float32)
    b1 = 0.1 * jax.random.normal(ks[2], (Cout,), jnp.float32)
    g1 = 1.0 + 0.1 * jax.random.normal(ks[3], (Cout,), jnp.float32)
    be1 = 0.1 * jax.random.normal(ks[4], (Cout,), jnp.float32)
    w2 = 0.1 * jax.random.normal(ks[5], (Cout, Cout, 3, 3), jnp.float32)
    b2 = 0.1 * jax.random.normal(ks[6], (Cout,), jnp.float32)
    g2 = 1.0 + 0.1 * jax.random.normal(ks[7], (Cout,), jnp.float32)
    be2 = 0.1 * jax.random.normal(ks[8], (Cout,), jnp.float32)
    wsk = 0.1 * jax.random.normal(ks[9], (Cout, Cin, 1, 1), jnp.float32)
    gsk = 1.0 + 0.1 * jax.random.normal(ks[10], (Cout,), jnp.float32)
    besk = 0.1 * jax.random.normal(ks[11], (Cout,), jnp.float32)
    params = (w1, b1, g1, be1, w2, b2, g2, be2, wsk, gsk, besk)

    out = jax.block_until_ready(residual_block_pallas(x, params))
    ref = jax.block_until_ready(residual_block_ref(x, params))
    assert out.shape == (N, Cout, H, W)
    np.testing.assert_allclose(np.asarray(out), np.asarray(ref),
                               atol=1e-3, rtol=1e-3)
    print("KERNEL_OK")
</pallas_src>

<mosaic_0001>
module attributes {stable_mosaic.version = 11 : i64} {
  func.func @kernel(%arg0: memref<8x1024xf32, #tpu.memory_space<vmem>>, %arg1: memref<1x768xf32, #tpu.memory_space<vmem>>, %arg2: memref<8x72xf32, #tpu.memory_space<vmem>>, %arg3: memref<8x1xf32, #tpu.memory_space<vmem>>, %arg4: memref<8x1xf32, #tpu.memory_space<vmem>>, %arg5: memref<8x72xf32, #tpu.memory_space<vmem>>, %arg6: memref<8x1xf32, #tpu.memory_space<vmem>>, %arg7: memref<8x1xf32, #tpu.memory_space<vmem>>, %arg8: memref<8x8xf32, #tpu.memory_space<vmem>>, %arg9: memref<8x1xf32, #tpu.memory_space<vmem>>, %arg10: memref<8x1xf32, #tpu.memory_space<vmem>>, %arg11: memref<8x768xf32, #tpu.memory_space<vmem>>, %arg12: memref<8x1024xf32, #tpu.memory_space<vmem>>) attributes {dimension_semantics = [], scalar_prefetch = 0 : i64, scratch_operands = 1 : i64, tpu.core_type = #tpu.core_type<tc>} {
    %c0 = arith.constant 0 : index
    %c0_0 = arith.constant 0 : index
    %0 = vector.load %arg1[%c0, %c0_0] : memref<1x768xf32, #tpu.memory_space<vmem>>, vector<1x768xf32>
    %c0_1 = arith.constant 0 : index
    %c109 = arith.constant 109 : index
    %1 = vector.load %arg0[%c0_1, %c109] : memref<8x1024xf32, #tpu.memory_space<vmem>>, vector<8x768xf32>
    %c0_2 = arith.constant 0 : index
    %c110 = arith.constant 110 : index
    %2 = vector.load %arg0[%c0_2, %c110] : memref<8x1024xf32, #tpu.memory_space<vmem>>, vector<8x768xf32>
    %c0_3 = arith.constant 0 : index
    %c111 = arith.constant 111 : index
    %3 = vector.load %arg0[%c0_3, %c111] : memref<8x1024xf32, #tpu.memory_space<vmem>>, vector<8x768xf32>
    %c0_4 = arith.constant 0 : index
    %c127 = arith.constant 127 : index
    %4 = vector.load %arg0[%c0_4, %c127] : memref<8x1024xf32, #tpu.memory_space<vmem>>, vector<8x768xf32>
    %c0_5 = arith.constant 0 : index
    %c128 = arith.constant 128 : index
    %5 = vector.load %arg0[%c0_5, %c128] : memref<8x1024xf32, #tpu.memory_space<vmem>>, vector<8x768xf32>
    %c0_6 = arith.constant 0 : index
    %c129 = arith.constant 129 : index
    %6 = vector.load %arg0[%c0_6, %c129] : memref<8x1024xf32, #tpu.memory_space<vmem>>, vector<8x768xf32>
    %c0_7 = arith.constant 0 : index
    %c145 = arith.constant 145 : index
    %7 = vector.load %arg0[%c0_7, %c145] : memref<8x1024xf32, #tpu.memory_space<vmem>>, vector<8x768xf32>
    %c0_8 = arith.constant 0 : index
    %c146 = arith.constant 146 : index
    %8 = vector.load %arg0[%c0_8, %c146] : memref<8x1024xf32, #tpu.memory_space<vmem>>, vector<8x768xf32>
    %c0_9 = arith.constant 0 : index
    %c147 = arith.constant 147 : index
    %9 = vector.load %arg0[%c0_9, %c147] : memref<8x1024xf32, #tpu.memory_space<vmem>>, vector<8x768xf32>
    %10 = tpu.concatenate %1, %2, %3, %4, %5, %6, %7, %8, %9 in 0 : vector<8x768xf32>, vector<8x768xf32>, vector<8x768xf32>, vector<8x768xf32>, vector<8x768xf32>, vector<8x768xf32>, vector<8x768xf32>, vector<8x768xf32>, vector<8x768xf32> -> vector<72x768xf32>
    %c0_10 = arith.constant 0 : index
    %c0_11 = arith.constant 0 : index
    %11 = vector.load %arg2[%c0_10, %c0_11] : memref<8x72xf32, #tpu.memory_space<vmem>>, vector<8x72xf32>
    %cst = arith.constant dense<0.000000e+00> : vector<8x768xf32>
    %12 = tpu.matmul %11, %10, %cst {dimension_numbers = #tpu.dot_dimension_numbers<[1], [0], [0], [1], [0, 0, 1, 1], [], []>} : vector<8x72xf32>, vector<72x768xf32>, vector<8x768xf32> -> vector<8x768xf32>
    %c0_12 = arith.constant 0 : index
    %c0_13 = arith.constant 0 : index
    %13 = vector.load %arg3[%c0_12, %c0_13] : memref<8x1xf32, #tpu.memory_space<vmem>>, vector<8x1xf32>
    %c0_14 = arith.constant 0 : index
    %c0_15 = arith.constant 0 : index
    %14 = vector.load %arg4[%c0_14, %c0_15] : memref<8x1xf32, #tpu.memory_space<vmem>>, vector<8x1xf32>
    %15 = vector.broadcast %0 : vector<1x768xf32> to vector<8x768xf32>
    %16 = arith.mulf %12, %15 : vector<8x768xf32>
    %cst_16 = arith.constant dense<0.000000e+00> : vector<8xf32>
    %17 = vector.multi_reduction <add>, %16, %cst_16 [1] : vector<8x768xf32> to vector<8xf32>
    %18 = vector.shape_cast %17 : vector<8xf32> to vector<8x1xf32>
    %19 = arith.mulf %16, %16 : vector<8x768xf32>
    %cst_17 = arith.constant dense<0.000000e+00> : vector<8xf32>
    %20 = vector.multi_reduction <add>, %19, %cst_17 [1] : vector<8x768xf32> to vector<8xf32>
    %21 = vector.shape_cast %20 : vector<8xf32> to vector<8x1xf32>
    %cst_18 = arith.constant 0.001953125 : f32
    %22 = vector.broadcast %cst_18 : f32 to vector<8x1xf32>
    %23 = arith.mulf %18, %22 : vector<8x1xf32>
    %cst_19 = arith.constant 0.001953125 : f32
    %24 = vector.broadcast %cst_19 : f32 to vector<8x1xf32>
    %25 = arith.mulf %21, %24 : vector<8x1xf32>
    %26 = arith.mulf %23, %23 : vector<8x1xf32>
    %27 = arith.subf %25, %26 : vector<8x1xf32>
    %cst_20 = arith.constant 9.99999974E-6 : f32
    %28 = vector.broadcast %cst_20 : f32 to vector<8x1xf32>
    %29 = arith.addf %27, %28 : vector<8x1xf32>
    %30 = math.rsqrt %29 : vector<8x1xf32>
    %31 = arith.mulf %13, %30 : vector<8x1xf32>
    %32 = arith.mulf %23, %31 : vector<8x1xf32>
    %33 = arith.subf %14, %32 : vector<8x1xf32>
    %34 = vector.broadcast %31 : vector<8x1xf32> to vector<8x768xf32>
    %35 = arith.mulf %12, %34 : vector<8x768xf32>
    %36 = vector.broadcast %33 : vector<8x1xf32> to vector<8x768xf32>
    %37 = arith.addf %35, %36 : vector<8x768xf32>
    %cst_21 = arith.constant 0.000000e+00 : f32
    %38 = vector.broadcast %cst_21 : f32 to vector<8x768xf32>
    %39 = arith.maximumf %37, %38 : vector<8x768xf32>
    %40 = vector.broadcast %0 : vector<1x768xf32> to vector<8x768xf32>
    %41 = arith.mulf %39, %40 : vector<8x768xf32>
    %cst_22 = arith.constant 0.000000e+00 : f32
    %42 = vector.broadcast %cst_22 : f32 to vector<8x128xf32>
    %c0_23 = arith.constant 0 : index
    %c0_24 = arith.constant 0 : index
    %43 = vector.load %arg12[%c0_23, %c0_24] : memref<8x1024xf32, #tpu.memory_space<vmem>>, vector<8x128xf32>
    tpu.vector_store %arg12[%c0_23, %c0_24], %42 {strides = array<i32>} : memref<8x1024xf32, #tpu.memory_space<vmem>>, vector<8x128xf32>,
    %cst_25 = arith.constant 0.000000e+00 : f32
    %44 = vector.broadcast %cst_25 : f32 to vector<8x128xf32>
    %c0_26 = arith.constant 0 : index
    %c896 = arith.constant 896 : index
    %45 = vector.load %arg12[%c0_26, %c896] : memref<8x1024xf32, #tpu.memory_space<vmem>>, vector<8x128xf32>
    tpu.vector_store %arg12[%c0_26, %c896], %44 {strides = array<i32>} : memref<8x1024xf32, #tpu.memory_space<vmem>>, vector<8x128xf32>,
    %c0_27 = arith.constant 0 : index
    %c128_28 = arith.constant 128 : index
    %46 = vector.load %arg12[%c0_27, %c128_28] : memref<8x1024xf32, #tpu.memory_space<vmem>>, vector<8x768xf32>
    tpu.vector_store %arg12[%c0_27, %c128_28], %41 {strides = array<i32>} : memref<8x1024xf32, #tpu.memory_space<vmem>>, vector<8x768xf32>,
    %c0_29 = arith.constant 0 : index
    %c0_30 = arith.constant 0 : index
    %47 = vector.load %arg5[%c0_29, %c0_30] : memref<8x72xf32, #tpu.memory_space<vmem>>, vector<8x72xf32>
    %c0_31 = arith.constant 0 : index
    %c109_32 = arith.constant 109 : index
    %48 = vector.load %arg12[%c0_31, %c109_32] : memref<8x1024xf32, #tpu.memory_space<vmem>>, vector<8x768xf32>
    %c0_33 = arith.constant 0 : index
    %c110_34 = arith.constant 110 : index
    %49 = vector.load %arg12[%c0_33, %c110_34] : memref<8x1024xf32, #tpu.memory_space<vmem>>, vector<8x768xf32>
    %c0_35 = arith.constant 0 : index
    %c111_36 = arith.constant 111 : index
    %50 = vector.load %arg12[%c0_35, %c111_36] : memref<8x1024xf32, #tpu.memory_space<vmem>>, vector<8x768xf32>
    %c0_37 = arith.constant 0 : index
    %c127_38 = arith.constant 127 : index
    %51 = vector.load %arg12[%c0_37, %c127_38] : memref<8x1024xf32, #tpu.memory_space<vmem>>, vector<8x768xf32>
    %c0_39 = arith.constant 0 : index
    %c128_40 = arith.constant 128 : index
    %52 = vector.load %arg12[%c0_39, %c128_40] : memref<8x1024xf32, #tpu.memory_space<vmem>>, vector<8x768xf32>
    %c0_41 = arith.constant 0 : index
    %c129_42 = arith.constant 129 : index
    %53 = vector.load %arg12[%c0_41, %c129_42] : memref<8x1024xf32, #tpu.memory_space<vmem>>, vector<8x768xf32>
    %c0_43 = arith.constant 0 : index
    %c145_44 = arith.constant 145 : index
    %54 = vector.load %arg12[%c0_43, %c145_44] : memref<8x1024xf32, #tpu.memory_space<vmem>>, vector<8x768xf32>
    %c0_45 = arith.constant 0 : index
    %c146_46 = arith.constant 146 : index
    %55 = vector.load %arg12[%c0_45, %c146_46] : memref<8x1024xf32, #tpu.memory_space<vmem>>, vector<8x768xf32>
    %c0_47 = arith.constant 0 : index
    %c147_48 = arith.constant 147 : index
    %56 = vector.load %arg12[%c0_47, %c147_48] : memref<8x1024xf32, #tpu.memory_space<vmem>>, vector<8x768xf32>
    %57 = tpu.concatenate %48, %49, %50, %51, %52, %53, %54, %55, %56 in 0 : vector<8x768xf32>, vector<8x768xf32>, vector<8x768xf32>, vector<8x768xf32>, vector<8x768xf32>, vector<8x768xf32>, vector<8x768xf32>, vector<8x768xf32>, vector<8x768xf32> -> vector<72x768xf32>
    %cst_49 = arith.constant dense<0.000000e+00> : vector<8x768xf32>
    %58 = tpu.matmul %47, %57, %cst_49 {dimension_numbers = #tpu.dot_dimension_numbers<[1], [0], [0], [1], [0, 0, 1, 1], [], []>} : vector<8x72xf32>, vector<72x768xf32>, vector<8x768xf32> -> vector<8x768xf32>
    %c0_50 = arith.constant 0 : index
    %c0_51 = arith.constant 0 : index
    %59 = vector.load %arg6[%c0_50, %c0_51] : memref<8x1xf32, #tpu.memory_space<vmem>>, vector<8x1xf32>
    %c0_52 = arith.constant 0 : index
    %c0_53 = arith.constant 0 : index
    %60 = vector.load %arg7[%c0_52, %c0_53] : memref<8x1xf32, #tpu.memory_space<vmem>>, vector<8x1xf32>
    %61 = vector.broadcast %0 : vector<1x768xf32> to vector<8x768xf32>
    %62 = arith.mulf %58, %61 : vector<8x768xf32>
    %cst_54 = arith.constant dense<0.000000e+00> : vector<8xf32>
    %63 = vector.multi_reduction <add>, %62, %cst_54 [1] : vector<8x768xf32> to vector<8xf32>
    %64 = vector.shape_cast %63 : vector<8xf32> to vector<8x1xf32>
    %65 = arith.mulf %62, %62 : vector<8x768xf32>
    %cst_55 = arith.constant dense<0.000000e+00> : vector<8xf32>
    %66 = vector.multi_reduction <add>, %65, %cst_55 [1] : vector<8x768xf32> to vector<8xf32>
    %67 = vector.shape_cast %66 : vector<8xf32> to vector<8x1xf32>
    %cst_56 = arith.constant 0.001953125 : f32
    %68 = vector.broadcast %cst_56 : f32 to vector<8x1xf32>
    %69 = arith.mulf %64, %68 : vector<8x1xf32>
    %cst_57 = arith.constant 0.001953125 : f32
    %70 = vector.broadcast %cst_57 : f32 to vector<8x1xf32>
    %71 = arith.mulf %67, %70 : vector<8x1xf32>
    %72 = arith.mulf %69, %69 : vector<8x1xf32>
    %73 = arith.subf %71, %72 : vector<8x1xf32>
    %cst_58 = arith.constant 9.99999974E-6 : f32
    %74 = vector.broadcast %cst_58 : f32 to vector<8x1xf32>
    %75 = arith.addf %73, %74 : vector<8x1xf32>
    %76 = math.rsqrt %75 : vector<8x1xf32>
    %77 = arith.mulf %59, %76 : vector<8x1xf32>
    %78 = arith.mulf %69, %77 : vector<8x1xf32>
    %79 = arith.subf %60, %78 : vector<8x1xf32>
    %80 = vector.broadcast %77 : vector<8x1xf32> to vector<8x768xf32>
    %81 = arith.mulf %58, %80 : vector<8x768xf32>
    %82 = vector.broadcast %79 : vector<8x1xf32> to vector<8x768xf32>
    %83 = arith.addf %81, %82 : vector<8x768xf32>
    %c0_59 = arith.constant 0 : index
    %c128_60 = arith.constant 128 : index
    %84 = vector.load %arg0[%c0_59, %c128_60] : memref<8x1024xf32, #tpu.memory_space<vmem>>, vector<8x768xf32>
    %c0_61 = arith.constant 0 : index
    %c0_62 = arith.constant 0 : index
    %85 = vector.load %arg8[%c0_61, %c0_62] : memref<8x8xf32, #tpu.memory_space<vmem>>, vector<8x8xf32>
    %cst_63 = arith.constant dense<0.000000e+00> : vector<8x768xf32>
    %86 = tpu.matmul %85, %84, %cst_63 {dimension_numbers = #tpu.dot_dimension_numbers<[1], [0], [0], [1], [0, 0, 1, 1], [], []>} : vector<8x8xf32>, vector<8x768xf32>, vector<8x768xf32> -> vector<8x768xf32>
    %c0_64 = arith.constant 0 : index
    %c0_65 = arith.constant 0 : index
    %87 = vector.load %arg9[%c0_64, %c0_65] : memref<8x1xf32, #tpu.memory_space<vmem>>, vector<8x1xf32>
    %c0_66 = arith.constant 0 : index
    %c0_67 = arith.constant 0 : index
    %88 = vector.load %arg10[%c0_66, %c0_67] : memref<8x1xf32, #tpu.memory_space<vmem>>, vector<8x1xf32>
    %89 = vector.broadcast %0 : vector<1x768xf32> to vector<8x768xf32>
    %90 = arith.mulf %86, %89 : vector<8x768xf32>
    %cst_68 = arith.constant dense<0.000000e+00> : vector<8xf32>
    %91 = vector.multi_reduction <add>, %90, %cst_68 [1] : vector<8x768xf32> to vector<8xf32>
    %92 = vector.shape_cast %91 : vector<8xf32> to vector<8x1xf32>
    %93 = arith.mulf %90, %90 : vector<8x768xf32>
    %cst_69 = arith.constant dense<0.000000e+00> : vector<8xf32>
    %94 = vector.multi_reduction <add>, %93, %cst_69 [1] : vector<8x768xf32> to vector<8xf32>
    %95 = vector.shape_cast %94 : vector<8xf32> to vector<8x1xf32>
    %cst_70 = arith.constant 0.001953125 : f32
    %96 = vector.broadcast %cst_70 : f32 to vector<8x1xf32>
    %97 = arith.mulf %92, %96 : vector<8x1xf32>
    %cst_71 = arith.constant 0.001953125 : f32
    %98 = vector.broadcast %cst_71 : f32 to vector<8x1xf32>
    %99 = arith.mulf %95, %98 : vector<8x1xf32>
    %100 = arith.mulf %97, %97 : vector<8x1xf32>
    %101 = arith.subf %99, %100 : vector<8x1xf32>
    %cst_72 = arith.constant 9.99999974E-6 : f32
    %102 = vector.broadcast %cst_72 : f32 to vector<8x1xf32>
    %103 = arith.addf %101, %102 : vector<8x1xf32>
    %104 = math.rsqrt %103 : vector<8x1xf32>
    %105 = arith.mulf %87, %104 : vector<8x1xf32>
    %106 = arith.mulf %97, %105 : vector<8x1xf32>
    %107 = arith.subf %88, %106 : vector<8x1xf32>
    %108 = vector.broadcast %105 : vector<8x1xf32> to vector<8x768xf32>
    %109 = arith.mulf %86, %108 : vector<8x768xf32>
    %110 = vector.broadcast %107 : vector<8x1xf32> to vector<8x768xf32>
    %111 = arith.addf %109, %110 : vector<8x768xf32>
    %112 = arith.addf %83, %111 : vector<8x768xf32>
    %cst_73 = arith.constant 0.000000e+00 : f32
    %113 = vector.broadcast %cst_73 : f32 to vector<8x768xf32>
    %114 = arith.maximumf %112, %113 : vector<8x768xf32>
    %c0_74 = arith.constant 0 : index
    %c0_75 = arith.constant 0 : index
    %115 = vector.load %arg11[%c0_74, %c0_75] : memref<8x768xf32, #tpu.memory_space<vmem>>, vector<8x768xf32>
    tpu.vector_store %arg11[%c0_74, %c0_75], %114 {strides = array<i32>} : memref<8x768xf32, #tpu.memory_space<vmem>>, vector<8x768xf32>,
    return
  }
}

</mosaic_0001>

<llo_original>
// kernel: tpu_custom_call.1
$region0: #{tpu_custom_call.1}
  #allocation0 [shape = 'u32[]', space=smem, size = 0x4, offset = 0x4, fixed_abs, tag = 'smem constant byte address 0x4 - core index']
  #allocation1 [shape = 'u32[144,128]{1,0:T(1,128)}', space=vmem, size = 0x12000, scoped, tag = 'internal scratch']
  #allocation2 [shape = 'f32[8,1024]{1,0:T(8,128)}', space=vmem, size = 0x8000, scoped, tag = 'scratch operand']
  %s0 = inlined_call_operand.hbm [shape: f32[8,1024], index: 0, kind: input, shape index: {}]
  %s1 = inlined_call_operand.vmem [shape: f32[1,768], index: 1, kind: input, shape index: {}]
  %s2 = inlined_call_operand.vmem [shape: f32[8,72], index: 2, kind: input, shape index: {}]
  %s3 = inlined_call_operand.vmem [shape: f32[8,1], index: 3, kind: input, shape index: {}]
  %s4 = inlined_call_operand.vmem [shape: f32[8,1], index: 4, kind: input, shape index: {}]
  %s5 = inlined_call_operand.vmem [shape: f32[8,72], index: 5, kind: input, shape index: {}]
  %s6 = inlined_call_operand.vmem [shape: f32[8,1], index: 6, kind: input, shape index: {}]
  %s7 = inlined_call_operand.vmem [shape: f32[8,1], index: 7, kind: input, shape index: {}]
  %s8 = inlined_call_operand.vmem [shape: f32[8,8], index: 8, kind: input, shape index: {}]
  %s9 = inlined_call_operand.vmem [shape: f32[8,1], index: 9, kind: input, shape index: {}]
  %s10 = inlined_call_operand.vmem [shape: f32[8,1], index: 10, kind: input, shape index: {}]
  %s11 = inlined_call_operand.hbm [shape: f32[8,768], index: 11, kind: output, shape index: {}]
  %s12 = sld [smem:[#allocation0]]
  $region58: #{tpu_custom_call.1} parent=0
    _
  %s14 = ssub.s32 1, %s12
  %s15 = scalar_select 0, %s14, %s12
  $region1: #{tpu_custom_call.1} parent=0
    #allocation3 [shape = 'u8[32768]{0}', space=vmem, size = 0x8000, scoped, tag = 'input window, operand 0, single buffered']
    #allocation4 [shape = 's32[1]{0}', space=sflag, size = 0x4, scoped, tag = 'scoped memory for tpu_custom_call.1']
    #allocation5 [shape = 's32[1]{0}', space=sflag, size = 0x4, scoped, tag = 'scoped memory for tpu_custom_call.1']
    #allocation6 [shape = 'u8[24576]{0}', space=vmem, size = 0x6000, scoped, tag = 'output window, operand 0, single buffered']
    %16 = vsyncpa [#allocation4], 0
    %17 = vsyncpa [#allocation5], 0
    // Predicated region
    $region2: #{tpu_custom_call.1} parent=1 // pred_check
      _
    $region3: #{tpu_custom_call.1} parent=1 // pred_check_branch
      %19 = sbr.rel (0) target = $region5
    $region4: #{tpu_custom_call.1} parent=1 // pred_region
      %s21 = ssub.s32 1024, 1024
      %22 = vsyncadd [#allocation4], %s21
      %s24 = sshll.u32 [#allocation3], 4
      %s25 = int_to_ptr.vmem [resolvable:$true] %s24
      %27 = dma.hbm_to_vmem [thread:$0]  %s0, 1024, %s25, [#allocation4]
    $region5: #{tpu_custom_call.1} parent=1 // pred_fallthru
      _
    // Predicated region
    $region6: #{tpu_custom_call.1} parent=1 // pred_check
      _
    $region7: #{tpu_custom_call.1} parent=1 // pred_check_branch
      %29 = sbr.rel (0) target = $region9
    $region8: #{tpu_custom_call.1} parent=1 // pred_region
      _
    $region9: #{tpu_custom_call.1} parent=1 // pred_fallthru
      _
    // Predicated region
    $region10: #{tpu_custom_call.1} parent=1 // pred_check
      _
    $region11: #{tpu_custom_call.1} parent=1 // pred_check_branch
      %31 = sbr.rel (0) target = $region13
    $region12: #{tpu_custom_call.1} parent=1 // pred_region
      _
    $region13: #{tpu_custom_call.1} parent=1 // pred_fallthru
      _
    // Predicated region
    $region14: #{tpu_custom_call.1} parent=1 // pred_check
      _
    $region15: #{tpu_custom_call.1} parent=1 // pred_check_branch
      %33 = sbr.rel (0) target = $region17
    $region16: #{tpu_custom_call.1} parent=1 // pred_region
      _
    $region17: #{tpu_custom_call.1} parent=1 // pred_fallthru
      _
    // Predicated region
    $region18: #{tpu_custom_call.1} parent=1 // pred_check
      _
    $region19: #{tpu_custom_call.1} parent=1 // pred_check_branch
      %35 = sbr.rel (0) target = $region21
    $region20: #{tpu_custom_call.1} parent=1 // pred_region
      _
    $region21: #{tpu_custom_call.1} parent=1 // pred_fallthru
      _
    // Predicated region
    $region22: #{tpu_custom_call.1} parent=1 // pred_check
      _
    $region23: #{tpu_custom_call.1} parent=1 // pred_check_branch
      %37 = sbr.rel (0) target = $region25
    $region24: #{tpu_custom_call.1} parent=1 // pred_region
      _
    $region25: #{tpu_custom_call.1} parent=1 // pred_fallthru
      _
    // Predicated region
    $region26: #{tpu_custom_call.1} parent=1 // pred_check
      _
    $region27: #{tpu_custom_call.1} parent=1 // pred_check_branch
      %39 = sbr.rel (0) target = $region29
    $region28: #{tpu_custom_call.1} parent=1 // pred_region
      _
    $region29: #{tpu_custom_call.1} parent=1 // pred_fallthru
      _
    // Predicated region
    $region30: #{tpu_custom_call.1} parent=1 // pred_check
      _
    $region31: #{tpu_custom_call.1} parent=1 // pred_check_branch
      %41 = sbr.rel (0) target = $region33
    $region32: #{tpu_custom_call.1} parent=1 // pred_region
      _
    $region33: #{tpu_custom_call.1} parent=1 // pred_fallthru
      _
    // Predicated region
    $region34: #{tpu_custom_call.1} parent=1 // pred_check
      _
    $region35: #{tpu_custom_call.1} parent=1 // pred_check_branch
      %43 = sbr.rel (0) target = $region37
    $region36: #{tpu_custom_call.1} parent=1 // pred_region
      _
    $region37: #{tpu_custom_call.1} parent=1 // pred_fallthru
      _
    // Predicated region
    $region38: #{tpu_custom_call.1} parent=1 // pred_check
      _
    $region39: #{tpu_custom_call.1} parent=1 // pred_check_branch
      %45 = sbr.rel (0) target = $region41
    $region40: #{tpu_custom_call.1} parent=1 // pred_region
      _
    $region41: #{tpu_custom_call.1} parent=1 // pred_fallthru
      _
    // Predicated region
    $region42: #{tpu_custom_call.1} parent=1 // pred_check
      _
    $region43: #{tpu_custom_call.1} parent=1 // pred_check_branch
      %47 = sbr.rel (0) target = $region45
    $region44: #{tpu_custom_call.1} parent=1 // pred_region
      _
    $region45: #{tpu_custom_call.1} parent=1 // pred_fallthru
      _
    // Predicated region
    $region46: #{tpu_custom_call.1} parent=1 // pred_check
      _
    $region47: #{tpu_custom_call.1} parent=1 // pred_check_branch
      %49 = sbr.rel (0) target = $region49
    $region48: #{tpu_custom_call.1} parent=1 // pred_region
      %50 = dma.done [#allocation4], 1024
    $region49: #{tpu_custom_call.1} parent=1 // pred_fallthru
      _
    %v51 = vld [vmem:[%s1] sm:$0x3f]
    %v52 = vld [vmem:[#allocation3] sm:$0xff]
    %v53 = vld [vmem:[#allocation3 + $0x8] sm:$0xff]
    %v54 = vld [vmem:[#allocation3 + $0x10] sm:$0xff]
    %v55 = vld [vmem:[#allocation3 + $0x18] sm:$0xff]
    %v56 = vld [vmem:[#allocation3 + $0x20] sm:$0xff]
    %v57 = vld [vmem:[#allocation3 + $0x28] sm:$0xff]
    %v58 = vld [vmem:[#allocation3 + $0x30] sm:$0xff]
    %v59 = vld [vmem:[#allocation3 + $0x8] sm:$0xff]
    %v60 = vld [vmem:[#allocation3 + $0x10] sm:$0xff]
    %v61 = vld [vmem:[#allocation3 + $0x18] sm:$0xff]
    %v62 = vld [vmem:[#allocation3 + $0x20] sm:$0xff]
    %v63 = vld [vmem:[#allocation3 + $0x28] sm:$0xff]
    %v64 = vld [vmem:[#allocation3 + $0x30] sm:$0xff]
    %v65 = vld [vmem:[#allocation3 + $0x38] sm:$0xff]
    %73 = vrot.lane.b32.xlu0 %v52, 127
    %v74 = vpop.permute.xlu0 %73
    %75 = vrot.lane.b32.xlu0 %v53, 127
    %v76 = vpop.permute.xlu0 %75
    %77 = vrot.lane.b32.xlu0 %v54, 127
    %v78 = vpop.permute.xlu0 %77
    %79 = vrot.lane.b32.xlu0 %v55, 127
    %v80 = vpop.permute.xlu0 %79
    %81 = vrot.lane.b32.xlu0 %v56, 127
    %v82 = vpop.permute.xlu0 %81
    %83 = vrot.lane.b32.xlu0 %v57, 127
    %v84 = vpop.permute.xlu0 %83
    %85 = vrot.lane.b32.xlu0 %v58, 127
    %v86 = vpop.permute.xlu0 %85
    %vm87 = vcmask 1039360
    %v88 = vsel %vm87, %v74, %v76
    %v89 = vsel %vm87, %v76, %v78
    %v90 = vsel %vm87, %v78, %v80
    %v91 = vsel %vm87, %v80, %v82
    %v92 = vsel %vm87, %v82, %v84
    %v93 = vsel %vm87, %v84, %v86
    %94 = vrot.lane.b32.xlu0 %v52, 126
    %v95 = vpop.permute.xlu0 %94
    %96 = vrot.lane.b32.xlu0 %v53, 126
    %v97 = vpop.permute.xlu0 %96
    %98 = vrot.lane.b32.xlu0 %v54, 126
    %v99 = vpop.permute.xlu0 %98
    %100 = vrot.lane.b32.xlu0 %v55, 126
    %v101 = vpop.permute.xlu0 %100
    %102 = vrot.lane.b32.xlu0 %v56, 126
    %v103 = vpop.permute.xlu0 %102
    %104 = vrot.lane.b32.xlu0 %v57, 126
    %v105 = vpop.permute.xlu0 %104
    %106 = vrot.lane.b32.xlu0 %v58, 126
    %v107 = vpop.permute.xlu0 %106
    %vm108 = vcmask 1031168
    %v109 = vsel %vm108, %v95, %v97
    %v110 = vsel %vm108, %v97, %v99
    %v111 = vsel %vm108, %v99, %v101
    %v112 = vsel %vm108, %v101, %v103
    %v113 = vsel %vm108, %v103, %v105
    %v114 = vsel %vm108, %v105, %v107
    %115 = vrot.lane.b32.xlu0 %v52, 110
    %v116 = vpop.permute.xlu0 %115
    %117 = vrot.lane.b32.xlu0 %v53, 110
    %v118 = vpop.permute.xlu0 %117
    %119 = vrot.lane.b32.xlu0 %v54, 110
    %v120 = vpop.permute.xlu0 %119
    %121 = vrot.lane.b32.xlu0 %v55, 110
    %v122 = vpop.permute.xlu0 %121
    %123 = vrot.lane.b32.xlu0 %v56, 110
    %v124 = vpop.permute.xlu0 %123
    %125 = vrot.lane.b32.xlu0 %v57, 110
    %v126 = vpop.permute.xlu0 %125
    %127 = vrot.lane.b32.xlu0 %v58, 110
    %v128 = vpop.permute.xlu0 %127
    %vm129 = vcmask 900096
    %v130 = vsel %vm129, %v116, %v118
    %v131 = vsel %vm129, %v118, %v120
    %v132 = vsel %vm129, %v120, %v122
    %v133 = vsel %vm129, %v122, %v124
    %v134 = vsel %vm129, %v124, %v126
    %v135 = vsel %vm129, %v126, %v128
    %136 = vrot.lane.b32.xlu0 %v53, 109
    %v137 = vpop.permute.xlu0 %136
    %138 = vrot.lane.b32.xlu0 %v54, 109
    %v139 = vpop.permute.xlu0 %138
    %140 = vrot.lane.b32.xlu0 %v55, 109
    %v141 = vpop.permute.xlu0 %140
    %142 = vrot.lane.b32.xlu0 %v56, 109
    %v143 = vpop.permute.xlu0 %142
    %144 = vrot.lane.b32.xlu0 %v57, 109
    %v145 = vpop.permute.xlu0 %144
    %146 = vrot.lane.b32.xlu0 %v58, 109
    %v147 = vpop.permute.xlu0 %146
    %vm148 = vcmask 891904
    %v149 = vsel %vm148, %v137, %v139
    %v150 = vsel %vm148, %v139, %v141
    %v151 = vsel %vm148, %v141, %v143
    %v152 = vsel %vm148, %v143, %v145
    %v153 = vsel %vm148, %v145, %v147
    %161 = vrot.lane.b32.xlu0 %v59, 108
    %v162 = vpop.permute.xlu0 %161
    %163 = vrot.lane.b32.xlu0 %v60, 108
    %v164 = vpop.permute.xlu0 %163
    %165 = vrot.lane.b32.xlu0 %v61, 108
    %v166 = vpop.permute.xlu0 %165
    %167 = vrot.lane.b32.xlu0 %v62, 108
    %v168 = vpop.permute.xlu0 %167
    %169 = vrot.lane.b32.xlu0 %v63, 108
    %v170 = vpop.permute.xlu0 %169
    %171 = vrot.lane.b32.xlu0 %v64, 108
    %v172 = vpop.permute.xlu0 %171
    %173 = vrot.lane.b32.xlu0 %v65, 108
    %v174 = vpop.permute.xlu0 %173
    %vm175 = vcmask 883712
    %v176 = vsel %vm175, %v162, %v164
    %v177 = vsel %vm175, %v164, %v166
    %v178 = vsel %vm175, %v166, %v168
    %v179 = vsel %vm175, %v168, %v170
    %v180 = vsel %vm175, %v170, %v172
    %v181 = vsel %vm175, %v172, %v174
    %182 = vrot.lane.b32.xlu0 %v59, 92
    %v183 = vpop.permute.xlu0 %182
    %184 = vrot.lane.b32.xlu0 %v60, 92
    %v185 = vpop.permute.xlu0 %184
    %186 = vrot.lane.b32.xlu0 %v61, 92
    %v187 = vpop.permute.xlu0 %186
    %188 = vrot.lane.b32.xlu0 %v62, 92
    %v189 = vpop.permute.xlu0 %188
    %190 = vrot.lane.b32.xlu0 %v63, 92
    %v191 = vpop.permute.xlu0 %190
    %192 = vrot.lane.b32.xlu0 %v64, 92
    %v193 = vpop.permute.xlu0 %192
    %194 = vrot.lane.b32.xlu0 %v65, 92
    %v195 = vpop.permute.xlu0 %194
    %vm196 = vcmask 752640
    %v197 = vsel %vm196, %v183, %v185
    %v198 = vsel %vm196, %v185, %v187
    %v199 = vsel %vm196, %v187, %v189
    %v200 = vsel %vm196, %v189, %v191
    %v201 = vsel %vm196, %v191, %v193
    %v202 = vsel %vm196, %v193, %v195
    %203 = vrot.lane.b32.xlu0 %v59, 91
    %v204 = vpop.permute.xlu0 %203
    %205 = vrot.lane.b32.xlu0 %v60, 91
    %v206 = vpop.permute.xlu0 %205
    %207 = vrot.lane.b32.xlu0 %v61, 91
    %v208 = vpop.permute.xlu0 %207
    %209 = vrot.lane.b32.xlu0 %v62, 91
    %v210 = vpop.permute.xlu0 %209
    %211 = vrot.lane.b32.xlu0 %v63, 91
    %v212 = vpop.permute.xlu0 %211
    %213 = vrot.lane.b32.xlu0 %v64, 91
    %v214 = vpop.permute.xlu0 %213
    %215 = vrot.lane.b32.xlu0 %v65, 91
    %v216 = vpop.permute.xlu0 %215
    %vm217 = vcmask 744448
    %v218 = vsel %vm217, %v204, %v206
    %v219 = vsel %vm217, %v206, %v208
    %v220 = vsel %vm217, %v208, %v210
    %v221 = vsel %vm217, %v210, %v212
    %v222 = vsel %vm217, %v212, %v214
    %v223 = vsel %vm217, %v214, %v216
    %224 = vrot.lane.b32.xlu0 %v59, 90
    %v225 = vpop.permute.xlu0 %224
    %226 = vrot.lane.b32.xlu0 %v60, 90
    %v227 = vpop.permute.xlu0 %226
    %228 = vrot.lane.b32.xlu0 %v61, 90
    %v229 = vpop.permute.xlu0 %228
    %230 = vrot.lane.b32.xlu0 %v62, 90
    %v231 = vpop.permute.xlu0 %230
    %232 = vrot.lane.b32.xlu0 %v63, 90
    %v233 = vpop.permute.xlu0 %232
    %234 = vrot.lane.b32.xlu0 %v64, 90
    %v235 = vpop.permute.xlu0 %234
    %236 = vrot.lane.b32.xlu0 %v65, 90
    %v237 = vpop.permute.xlu0 %236
    %vm238 = vcmask 736256
    %v239 = vsel %vm238, %v225, %v227
    %v240 = vsel %vm238, %v227, %v229
    %v241 = vsel %vm238, %v229, %v231
    %v242 = vsel %vm238, %v231, %v233
    %v243 = vsel %vm238, %v233, %v235
    %v244 = vsel %vm238, %v235, %v237
    %v245 = vld [vmem:[%s2] sm:$0xff]
    %246 = vrot.lane.b32.xlu0 %v52, 19
    %v247 = vpop.permute.xlu0 %246
    %248 = vrot.lane.b32.xlu0 %v53, 19
    %v249 = vpop.permute.xlu0 %248
    %250 = vrot.lane.b32.xlu0 %v54, 19
    %v251 = vpop.permute.xlu0 %250
    %252 = vrot.lane.b32.xlu0 %v55, 19
    %v253 = vpop.permute.xlu0 %252
    %254 = vrot.lane.b32.xlu0 %v56, 19
    %v255 = vpop.permute.xlu0 %254
    %256 = vrot.lane.b32.xlu0 %v57, 19
    %v257 = vpop.permute.xlu0 %256
    %258 = vrot.lane.b32.xlu0 %v58, 19
    %v259 = vpop.permute.xlu0 %258
    %260 = vrot.lane.b32.xlu0 %v88, 19
    %v261 = vpop.permute.xlu0 %260
    %262 = vrot.lane.b32.xlu0 %v89, 19
    %v263 = vpop.permute.xlu0 %262
    %264 = vrot.lane.b32.xlu0 %v90, 19
    %v265 = vpop.permute.xlu0 %264
    %266 = vrot.lane.b32.xlu0 %v91, 19
    %v267 = vpop.permute.xlu0 %266
    %268 = vrot.lane.b32.xlu0 %v92, 19
    %v269 = vpop.permute.xlu0 %268
    %270 = vrot.lane.b32.xlu0 %v93, 19
    %v271 = vpop.permute.xlu0 %270
    %272 = vrot.lane.b32.xlu0 %v86, 19
    %v273 = vpop.permute.xlu0 %272
    %274 = vrot.lane.b32.xlu0 %v109, 19
    %v275 = vpop.permute.xlu0 %274
    %276 = vrot.lane.b32.xlu0 %v110, 19
    %v277 = vpop.permute.xlu0 %276
    %278 = vrot.lane.b32.xlu0 %v111, 19
    %v279 = vpop.permute.xlu0 %278
    %280 = vrot.lane.b32.xlu0 %v112, 19
    %v281 = vpop.permute.xlu0 %280
    %282 = vrot.lane.b32.xlu0 %v113, 19
    %v283 = vpop.permute.xlu0 %282
    %284 = vrot.lane.b32.xlu0 %v114, 19
    %v285 = vpop.permute.xlu0 %284
    %286 = vrot.lane.b32.xlu0 %v107, 19
    %v287 = vpop.permute.xlu0 %286
    %288 = vrot.lane.b32.xlu0 %v130, 19
    %v289 = vpop.permute.xlu0 %288
    %290 = vrot.lane.b32.xlu0 %v131, 19
    %v291 = vpop.permute.xlu0 %290
    %292 = vrot.lane.b32.xlu0 %v132, 19
    %v293 = vpop.permute.xlu0 %292
    %294 = vrot.lane.b32.xlu0 %v133, 19
    %v295 = vpop.permute.xlu0 %294
    %296 = vrot.lane.b32.xlu0 %v134, 19
    %v297 = vpop.permute.xlu0 %296
    %298 = vrot.lane.b32.xlu0 %v135, 19
    %v299 = vpop.permute.xlu0 %298
    %300 = vrot.lane.b32.xlu0 %v128, 19
    %v301 = vpop.permute.xlu0 %300
    %302 = vrot.lane.b32.xlu0 %v137, 19
    %v303 = vpop.permute.xlu0 %302
    %304 = vrot.lane.b32.xlu0 %v149, 19
    %v305 = vpop.permute.xlu0 %304
    %306 = vrot.lane.b32.xlu0 %v150, 19
    %v307 = vpop.permute.xlu0 %306
    %308 = vrot.lane.b32.xlu0 %v151, 19
    %v309 = vpop.permute.xlu0 %308
    %310 = vrot.lane.b32.xlu0 %v152, 19
    %v311 = vpop.permute.xlu0 %310
    %312 = vrot.lane.b32.xlu0 %v153, 19
    %v313 = vpop.permute.xlu0 %312
    %314 = vrot.lane.b32.xlu0 %v147, 19
    %v315 = vpop.permute.xlu0 %314
    %316 = vrot.lane.b32.xlu0 %v162, 19
    %v317 = vpop.permute.xlu0 %316
    %318 = vrot.lane.b32.xlu0 %v176, 19
    %v319 = vpop.permute.xlu0 %318
    %320 = vrot.lane.b32.xlu0 %v177, 19
    %v321 = vpop.permute.xlu0 %320
    %322 = vrot.lane.b32.xlu0 %v178, 19
    %v323 = vpop.permute.xlu0 %322
    %324 = vrot.lane.b32.xlu0 %v179, 19
    %v325 = vpop.permute.xlu0 %324
    %326 = vrot.lane.b32.xlu0 %v180, 19
    %v327 = vpop.permute.xlu0 %326
    %328 = vrot.lane.b32.xlu0 %v181, 19
    %v329 = vpop.permute.xlu0 %328
    %330 = vrot.lane.b32.xlu0 %v183, 19
    %v331 = vpop.permute.xlu0 %330
    %332 = vrot.lane.b32.xlu0 %v197, 19
    %v333 = vpop.permute.xlu0 %332
    %334 = vrot.lane.b32.xlu0 %v198, 19
    %v335 = vpop.permute.xlu0 %334
    %336 = vrot.lane.b32.xlu0 %v199, 19
    %v337 = vpop.permute.xlu0 %336
    %338 = vrot.lane.b32.xlu0 %v200, 19
    %v339 = vpop.permute.xlu0 %338
    %340 = vrot.lane.b32.xlu0 %v201, 19
    %v341 = vpop.permute.xlu0 %340
    %342 = vrot.lane.b32.xlu0 %v202, 19
    %v343 = vpop.permute.xlu0 %342
    %344 = vrot.lane.b32.xlu0 %v204, 19
    %v345 = vpop.permute.xlu0 %344
    %346 = vrot.lane.b32.xlu0 %v218, 19
    %v347 = vpop.permute.xlu0 %346
    %348 = vrot.lane.b32.xlu0 %v219, 19
    %v349 = vpop.permute.xlu0 %348
    %350 = vrot.lane.b32.xlu0 %v220, 19
    %v351 = vpop.permute.xlu0 %350
    %352 = vrot.lane.b32.xlu0 %v221, 19
    %v353 = vpop.permute.xlu0 %352
    %354 = vrot.lane.b32.xlu0 %v222, 19
    %v355 = vpop.permute.xlu0 %354
    %356 = vrot.lane.b32.xlu0 %v223, 19
    %v357 = vpop.permute.xlu0 %356
    %358 = vrot.lane.b32.xlu0 %v225, 19
    %v359 = vpop.permute.xlu0 %358
    %360 = vrot.lane.b32.xlu0 %v239, 19
    %v361 = vpop.permute.xlu0 %360
    %362 = vrot.lane.b32.xlu0 %v240, 19
    %v363 = vpop.permute.xlu0 %362
    %364 = vrot.lane.b32.xlu0 %v241, 19
    %v365 = vpop.permute.xlu0 %364
    %366 = vrot.lane.b32.xlu0 %v242, 19
    %v367 = vpop.permute.xlu0 %366
    %368 = vrot.lane.b32.xlu0 %v243, 19
    %v369 = vpop.permute.xlu0 %368
    %370 = vrot.lane.b32.xlu0 %v244, 19
    %v371 = vpop.permute.xlu0 %370
    %vm372 = vcmask 154624
    %v373 = vsel %vm372, %v247, %v249
    %v374 = vsel %vm372, %v249, %v251
    %v375 = vsel %vm372, %v251, %v253
    %v376 = vsel %vm372, %v253, %v255
    %v377 = vsel %vm372, %v255, %v257
    %v378 = vsel %vm372, %v257, %v259
    %v379 = vsel %vm372, %v261, %v263
    %v380 = vsel %vm372, %v263, %v265
    %v381 = vsel %vm372, %v265, %v267
    %v382 = vsel %vm372, %v267, %v269
    %v383 = vsel %vm372, %v269, %v271
    %v384 = vsel %vm372, %v271, %v273
    %v385 = vsel %vm372, %v275, %v277
    %v386 = vsel %vm372, %v277, %v279
    %v387 = vsel %vm372, %v279, %v281
    %v388 = vsel %vm372, %v281, %v283
    %v389 = vsel %vm372, %v283, %v285
    %v390 = vsel %vm372, %v285, %v287
    %v391 = vsel %vm372, %v289, %v291
    %v392 = vsel %vm372, %v291, %v293
    %v393 = vsel %vm372, %v293, %v295
    %v394 = vsel %vm372, %v295, %v297
    %v395 = vsel %vm372, %v297, %v299
    %v396 = vsel %vm372, %v299, %v301
    %v397 = vsel %vm372, %v303, %v305
    %v398 = vsel %vm372, %v305, %v307
    %v399 = vsel %vm372, %v307, %v309
    %v400 = vsel %vm372, %v309, %v311
    %v401 = vsel %vm372, %v311, %v313
    %v402 = vsel %vm372, %v313, %v315
    %v403 = vsel %vm372, %v317, %v319
    %v404 = vsel %vm372, %v319, %v321
    %v405 = vsel %vm372, %v321, %v323
    %v406 = vsel %vm372, %v323, %v325
    %v407 = vsel %vm372, %v325, %v327
    %v408 = vsel %vm372, %v327, %v329
    %v409 = vsel %vm372, %v331, %v333
    %v410 = vsel %vm372, %v333, %v335
    %v411 = vsel %vm372, %v335, %v337
    %v412 = vsel %vm372, %v337, %v339
    %v413 = vsel %vm372, %v339, %v341
    %v414 = vsel %vm372, %v341, %v343
    %v415 = vsel %vm372, %v345, %v347
    %v416 = vsel %vm372, %v347, %v349
    %v417 = vsel %vm372, %v349, %v351
    %v418 = vsel %vm372, %v351, %v353
    %v419 = vsel %vm372, %v353, %v355
    %v420 = vsel %vm372, %v355, %v357
    %v421 = vsel %vm372, %v359, %v361
    %v422 = vsel %vm372, %v361, %v363
    %v423 = vsel %vm372, %v363, %v365
    %v424 = vsel %vm372, %v365, %v367
    %v425 = vsel %vm372, %v367, %v369
    %v426 = vsel %vm372, %v369, %v371
    %vm481 = vcmask 588800
    %v483 = vsel %vm481, %v245, 0
    %485 = vmatprep.subr.mxu0 %v374
    %486 = vmatpush1.msra.mxu0 %v373
    %487 = vmatprep.subr.mxu0 %v380
    %488 = vmatpush1.msra.mxu0 %v379
    %489 = vmatprep.subr.mxu0 %v386
    %490 = vmatpush1.msra.mxu0 %v385
    %491 = vmatprep.subr.mxu0 %v392
    %492 = vmatpush1.msra.mxu0 %v391
    %493 = vmatprep.subr.mxu0 %v398
    %494 = vmatpush1.msra.mxu0 %v397
    %495 = vmatprep.subr.mxu0 %v404
    %496 = vmatpush1.msra.mxu0 %v403
    %497 = vmatprep.subr.mxu0 %v410
    %498 = vmatpush1.msra.mxu0 %v409
    %499 = vmatprep.subr.mxu0 %v416
    %500 = vmatpush1.msra.mxu0 %v415
    %501 = vmatprep.subr.mxu0 %v422
    %502 = vmatpush1.msra.mxu0 %v421
    %503 = vmatprep.subr.mxu0 0.0
    %504 = vmatpush1.msra.mxu0 0.0
    %505 = vmatprep.subr.mxu0 0.0
    %506 = vmatpush1.msra.mxu0 0.0
    %507 = vmatprep.subr.mxu0 0.0
    %508 = vmatpush1.msra.mxu0 0.0
    %509 = vmatprep.subr.mxu0 0.0
    %510 = vmatpush1.msra.mxu0 0.0
    %511 = vmatprep.subr.mxu0 0.0
    %512 = vmatpush1.msra.mxu0 0.0
    %513 = vmatprep.subr.mxu0 0.0
    %514 = vmatpush1.msra.mxu0 0.0
    %515 = vmatprep.subr.mxu0 0.0
    %516 = vmatpush1.msra.mxu0 0.0
    %517 = vmatprep.subr.mxu0 0.0
    %518 = vmatpush1.msra.mxu0 0.0
    %519 = vmatprep.subr.mxu0 0.0
    %520 = vmatpush1.msra.mxu0 0.0
    %521 = vmatprep.subr.mxu0 0.0
    %522 = vmatpush1.msra.mxu0 0.0
    %523 = vmatprep.subr.mxu0 0.0
    %524 = vmatpush1.msra.mxu0 0.0
    %525 = vmatprep.subr.mxu0 0.0
    %526 = vmatpush1.msra.mxu0 0.0
    %527 = vmatprep.subr.mxu0 0.0
    %528 = vmatpush1.msra.mxu0 0.0
    %529 = vmatprep.subr.mxu0 0.0
    %530 = vmatpush1.msra.mxu0 0.0
    %531 = vmatprep.subr.mxu0 0.0
    %532 = vmatpush1.msra.mxu0 0.0
    %533 = vmatprep.subr.mxu0 0.0
    %534 = vmatpush1.msra.mxu0 0.0
    %535 = vmatprep.subr.mxu0 0.0
    %536 = vmatpush1.msra.mxu0 0.0
    %537 = vmatprep.subr.mxu0 0.0
    %538 = vmatpush1.msra.mxu0 0.0
    %539 = vmatprep.subr.mxu0 0.0
    %540 = vmatpush1.msra.mxu0 0.0
    %541 = vmatprep.subr.mxu0 0.0
    %542 = vmatpush1.msra.mxu0 0.0
    %543 = vmatprep.subr.mxu0 0.0
    %544 = vmatpush1.msra.mxu0 0.0
    %545 = vmatprep.subr.mxu0 0.0
    %546 = vmatpush1.msra.mxu0 0.0
    %547 = vmatprep.subr.mxu0 0.0
    %548 = vmatpush1.msra.mxu0 0.0
    %549 = vmatprep.mubr.f32.mxu0 0.0
    %550 = vmatmul.mubr.f32.gmra.mrb[0].mxu0 %v483
    %v551 = vpop.f32.mrb[0].mxu0
    %v552 = vadd.f32 0.0, %v551
    %v553 = vpop.f32.mrb[0].mxu0
    %v554 = vadd.f32 0.0, %v553
    %555 = vdwg.mxu0
    %556 = vmatprep.subr.mxu0 %v376
    %557 = vmatpush1.msra.mxu0 %v375
    %558 = vmatprep.subr.mxu0 %v382
    %559 = vmatpush1.msra.mxu0 %v381
    %560 = vmatprep.subr.mxu0 %v388
    %561 = vmatpush1.msra.mxu0 %v387
    %562 = vmatprep.subr.mxu0 %v394
    %563 = vmatpush1.msra.mxu0 %v393
    %564 = vmatprep.subr.mxu0 %v400
    %565 = vmatpush1.msra.mxu0 %v399
    %566 = vmatprep.subr.mxu0 %v406
    %567 = vmatpush1.msra.mxu0 %v405
    %568 = vmatprep.subr.mxu0 %v412
    %569 = vmatpush1.msra.mxu0 %v411
    %570 = vmatprep.subr.mxu0 %v418
    %571 = vmatpush1.msra.mxu0 %v417
    %572 = vmatprep.subr.mxu0 %v424
    %573 = vmatpush1.msra.mxu0 %v423
    %574 = vmatprep.subr.mxu0 0.0
    %575 = vmatpush1.msra.mxu0 0.0
    %576 = vmatprep.subr.mxu0 0.0
    %577 = vmatpush1.msra.mxu0 0.0
    %578 = vmatprep.subr.mxu0 0.0
    %579 = vmatpush1.msra.mxu0 0.0
    %580 = vmatprep.subr.mxu0 0.0
    %581 = vmatpush1.msra.mxu0 0.0
    %582 = vmatprep.subr.mxu0 0.0
    %583 = vmatpush1.msra.mxu0 0.0
    %584 = vmatprep.subr.mxu0 0.0
    %585 = vmatpush1.msra.mxu0 0.0
    %586 = vmatprep.subr.mxu0 0.0
    %587 = vmatpush1.msra.mxu0 0.0
    %588 = vmatprep.subr.mxu0 0.0
    %589 = vmatpush1.msra.mxu0 0.0
    %590 = vmatprep.subr.mxu0 0.0
    %591 = vmatpush1.msra.mxu0 0.0
    %592 = vmatprep.subr.mxu0 0.0
    %593 = vmatpush1.msra.mxu0 0.0
    %594 = vmatprep.subr.mxu0 0.0
    %595 = vmatpush1.msra.mxu0 0.0
    %596 = vmatprep.subr.mxu0 0.0
    %597 = vmatpush1.msra.mxu0 0.0
    %598 = vmatprep.subr.mxu0 0.0
    %599 = vmatpush1.msra.mxu0 0.0
    %600 = vmatprep.subr.mxu0 0.0
    %601 = vmatpush1.msra.mxu0 0.0
    %602 = vmatprep.subr.mxu0 0.0
    %603 = vmatpush1.msra.mxu0 0.0
    %604 = vmatprep.subr.mxu0 0.0
    %605 = vmatpush1.msra.mxu0 0.0
    %606 = vmatprep.subr.mxu0 0.0
    %607 = vmatpush1.msra.mxu0 0.0
    %608 = vmatprep.subr.mxu0 0.0
    %609 = vmatpush1.msra.mxu0 0.0
    %610 = vmatprep.subr.mxu0 0.0
    %611 = vmatpush1.msra.mxu0 0.0
    %612 = vmatprep.subr.mxu0 0.0
    %613 = vmatpush1.msra.mxu0 0.0
    %614 = vmatprep.subr.mxu0 0.0
    %615 = vmatpush1.msra.mxu0 0.0
    %616 = vmatprep.subr.mxu0 0.0
    %617 = vmatpush1.msra.mxu0 0.0
    %618 = vmatprep.subr.mxu0 0.0
    %619 = vmatpush1.msra.mxu0 0.0
    %620 = vmatprep.mubr.f32.mxu0 0.0
    %621 = vmatmul.mubr.f32.gmra.mrb[0].mxu0 %v483
    %v622 = vpop.f32.mrb[0].mxu0
    %v623 = vadd.f32 0.0, %v622
    %v624 = vpop.f32.mrb[0].mxu0
    %v625 = vadd.f32 0.0, %v624
    %626 = vdwg.mxu0
    %627 = vmatprep.subr.mxu0 %v378
    %628 = vmatpush1.msra.mxu0 %v377
    %629 = vmatprep.subr.mxu0 %v384
    %630 = vmatpush1.msra.mxu0 %v383
    %631 = vmatprep.subr.mxu0 %v390
    %632 = vmatpush1.msra.mxu0 %v389
    %633 = vmatprep.subr.mxu0 %v396
    %634 = vmatpush1.msra.mxu0 %v395
    %635 = vmatprep.subr.mxu0 %v402
    %636 = vmatpush1.msra.mxu0 %v401
    %637 = vmatprep.subr.mxu0 %v408
    %638 = vmatpush1.msra.mxu0 %v407
    %639 = vmatprep.subr.mxu0 %v414
    %640 = vmatpush1.msra.mxu0 %v413
    %641 = vmatprep.subr.mxu0 %v420
    %642 = vmatpush1.msra.mxu0 %v419
    %643 = vmatprep.subr.mxu0 %v426
    %644 = vmatpush1.msra.mxu0 %v425
    %645 = vmatprep.subr.mxu0 0.0
    %646 = vmatpush1.msra.mxu0 0.0
    %647 = vmatprep.subr.mxu0 0.0
    %648 = vmatpush1.msra.mxu0 0.0
    %649 = vmatprep.subr.mxu0 0.0
    %650 = vmatpush1.msra.mxu0 0.0
    %651 = vmatprep.subr.mxu0 0.0
    %652 = vmatpush1.msra.mxu0 0.0
    %653 = vmatprep.subr.mxu0 0.0
    %654 = vmatpush1.msra.mxu0 0.0
    %655 = vmatprep.subr.mxu0 0.0
    %656 = vmatpush1.msra.mxu0 0.0
    %657 = vmatprep.subr.mxu0 0.0
    %658 = vmatpush1.msra.mxu0 0.0
    %659 = vmatprep.subr.mxu0 0.0
    %660 = vmatpush1.msra.mxu0 0.0
    %661 = vmatprep.subr.mxu0 0.0
    %662 = vmatpush1.msra.mxu0 0.0
    %663 = vmatprep.subr.mxu0 0.0
    %664 = vmatpush1.msra.mxu0 0.0
    %665 = vmatprep.subr.mxu0 0.0
    %666 = vmatpush1.msra.mxu0 0.0
    %667 = vmatprep.subr.mxu0 0.0
    %668 = vmatpush1.msra.mxu0 0.0
    %669 = vmatprep.subr.mxu0 0.0
    %670 = vmatpush1.msra.mxu0 0.0
    %671 = vmatprep.subr.mxu0 0.0
    %672 = vmatpush1.msra.mxu0 0.0
    %673 = vmatprep.subr.mxu0 0.0
    %674 = vmatpush1.msra.mxu0 0.0
    %675 = vmatprep.subr.mxu0 0.0
    %676 = vmatpush1.msra.mxu0 0.0
    %677 = vmatprep.subr.mxu0 0.0
    %678 = vmatpush1.msra.mxu0 0.0
    %679 = vmatprep.subr.mxu0 0.0
    %680 = vmatpush1.msra.mxu0 0.0
    %681 = vmatprep.subr.mxu0 0.0
    %682 = vmatpush1.msra.mxu0 0.0
    %683 = vmatprep.subr.mxu0 0.0
    %684 = vmatpush1.msra.mxu0 0.0
    %685 = vmatprep.subr.mxu0 0.0
    %686 = vmatpush1.msra.mxu0 0.0
    %687 = vmatprep.subr.mxu0 0.0
    %688 = vmatpush1.msra.mxu0 0.0
    %689 = vmatprep.subr.mxu0 0.0
    %690 = vmatpush1.msra.mxu0 0.0
    %691 = vmatprep.mubr.f32.mxu0 0.0
    %692 = vmatmul.mubr.f32.gmra.mrb[0].mxu0 %v483
    %v693 = vpop.f32.mrb[0].mxu0
    %v694 = vadd.f32 0.0, %v693
    %v695 = vpop.f32.mrb[0].mxu0
    %v696 = vadd.f32 0.0, %v695
    %697 = vdwg.mxu0
    %v698 = vld [vmem:[%s3] sm:$0xff]
    %v699 = vld [vmem:[%s4] sm:$0xff]
    %v701 = vlaneseq
    %v702 = vshrl.u32 %v701, 7
    %v703 = vsub.s32 0, %v702
    %v704 = vrot.slane %v51, %v703
    %v705 = vlaneseq
    %v706 = vshrl.u32 %v705, 7
    %v707 = vsub.s32 1, %v706
    %v708 = vrot.slane %v51, %v707
    %v709 = vlaneseq
    %v710 = vshrl.u32 %v709, 7
    %v711 = vsub.s32 2, %v710
    %v712 = vrot.slane %v51, %v711
    %v713 = vlaneseq
    %v714 = vshrl.u32 %v713, 7
    %v715 = vsub.s32 3, %v714
    %v716 = vrot.slane %v51, %v715
    %v717 = vlaneseq
    %v718 = vshrl.u32 %v717, 7
    %v719 = vsub.s32 4, %v718
    %v720 = vrot.slane %v51, %v719
    %v721 = vlaneseq
    %v722 = vshrl.u32 %v721, 7
    %v723 = vsub.s32 5, %v722
    %v724 = vrot.slane %v51, %v723
    %v731 = vmul.f32 %v552, %v704
    %v732 = vmul.f32 %v554, %v708
    %v733 = vmul.f32 %v623, %v712
    %v734 = vmul.f32 %v625, %v716
    %v735 = vmul.f32 %v694, %v720
    %v736 = vmul.f32 %v696, %v724
    %v737 = vadd.f32 %v731, %v732
    %v738 = vadd.f32 %v737, %v733
    %v739 = vadd.f32 %v738, %v734
    %v740 = vadd.f32 %v739, %v735
    %v741 = vadd.f32 %v740, %v736
    %742 = vadd.xlane.f32.xlu0 %v741
    %v743 = vpop.xlane.xlu0 %742
    %v744 = vmul.f32 %v731, %v731
    %v745 = vmul.f32 %v732, %v732
    %v746 = vmul.f32 %v733, %v733
    %v747 = vmul.f32 %v734, %v734
    %v748 = vmul.f32 %v735, %v735
    %v749 = vmul.f32 %v736, %v736
    %v750 = vadd.f32 %v744, %v745
    %v751 = vadd.f32 %v750, %v746
    %v752 = vadd.f32 %v751, %v747
    %v753 = vadd.f32 %v752, %v748
    %v754 = vadd.f32 %v753, %v749
    %755 = vadd.xlane.f32.xlu0 %v754
    %v756 = vpop.xlane.xlu0 %755
    %v757 = vmul.f32 %v743, 0.001953125
    %v758 = vmul.f32 %v756, 0.001953125
    %v759 = vmul.f32 %v757, %v757
    %v760 = vsub.f32 %v758, %v759
    %v761 = vadd.f32 %v760, 1e-05
    %v762 = vrsqrt.pop %v761
    %v763 = vmul.f32 %v698, %v762
    %v764 = vmul.f32 %v757, %v763
    %v765 = vsub.f32 %v699, %v764
    %767 = vset.pattern.permute.xlu0 0
    %768 = vperm.xlu0 %767, %v763
    %v769 = vpop.permute.xlu0 %768
    %v771 = vmul.f32 %v552, %v769
    %v772 = vmul.f32 %v554, %v769
    %v773 = vmul.f32 %v623, %v769
    %v774 = vmul.f32 %v625, %v769
    %v775 = vmul.f32 %v694, %v769
    %v776 = vmul.f32 %v696, %v769
    %778 = vset.pattern.permute.xlu0 0
    %779 = vperm.xlu0 %778, %v765
    %v780 = vpop.permute.xlu0 %779
    %v782 = vadd.f32 %v771, %v780
    %v783 = vadd.f32 %v772, %v780
    %v784 = vadd.f32 %v773, %v780
    %v785 = vadd.f32 %v774, %v780
    %v786 = vadd.f32 %v775, %v780
    %v787 = vadd.f32 %v776, %v780
    %v788 = vmax.f32 %v782, 0.0
    %v789 = vmax.f32 %v783, 0.0
    %v790 = vmax.f32 %v784, 0.0
    %v791 = vmax.f32 %v785, 0.0
    %v792 = vmax.f32 %v786, 0.0
    %v793 = vmax.f32 %v787, 0.0
    %v794 = vmul.f32 %v788, %v704
    %v795 = vmul.f32 %v789, %v708
    %v796 = vmul.f32 %v790, %v712
    %v797 = vmul.f32 %v791, %v716
    %v798 = vmul.f32 %v792, %v720
    %v799 = vmul.f32 %v793, %v724
    %800 = vst [vmem:[#allocation2] sm:$0xff] 0.0
    %801 = vst [vmem:[#allocation2 + $0x38] sm:$0xff] 0.0
    %802 = vst [vmem:[#allocation2 + $0x8] sm:$0xff] %v794
    %803 = vst [vmem:[#allocation2 + $0x10] sm:$0xff] %v795
    %804 = vst [vmem:[#allocation2 + $0x18] sm:$0xff] %v796
    %805 = vst [vmem:[#allocation2 + $0x20] sm:$0xff] %v797
    %806 = vst [vmem:[#allocation2 + $0x28] sm:$0xff] %v798
    %807 = vst [vmem:[#allocation2 + $0x30] sm:$0xff] %v799
    %v808 = vld [vmem:[%s5] sm:$0xff]
    %v809 = vld [vmem:[#allocation2] sm:$0xff]
    %v810 = vld [vmem:[#allocation2 + $0x8] sm:$0xff]
    %v811 = vld [vmem:[#allocation2 + $0x10] sm:$0xff]
    %v812 = vld [vmem:[#allocation2 + $0x18] sm:$0xff]
    %v813 = vld [vmem:[#allocation2 + $0x20] sm:$0xff]
    %v814 = vld [vmem:[#allocation2 + $0x28] sm:$0xff]
    %v815 = vld [vmem:[#allocation2 + $0x30] sm:$0xff]
    %v816 = vld [vmem:[#allocation2 + $0x8] sm:$0xff]
    %v817 = vld [vmem:[#allocation2 + $0x10] sm:$0xff]
    %v818 = vld [vmem:[#allocation2 + $0x18] sm:$0xff]
    %v819 = vld [vmem:[#allocation2 + $0x20] sm:$0xff]
    %v820 = vld [vmem:[#allocation2 + $0x28] sm:$0xff]
    %v821 = vld [vmem:[#allocation2 + $0x30] sm:$0xff]
    %v822 = vld [vmem:[#allocation2 + $0x38] sm:$0xff]
    %830 = vrot.lane.b32.xlu0 %v809, 127
    %v831 = vpop.permute.xlu0 %830
    %832 = vrot.lane.b32.xlu0 %v810, 127
    %v833 = vpop.permute.xlu0 %832
    %834 = vrot.lane.b32.xlu0 %v811, 127
    %v835 = vpop.permute.xlu0 %834
    %836 = vrot.lane.b32.xlu0 %v812, 127
    %v837 = vpop.permute.xlu0 %836
    %838 = vrot.lane.b32.xlu0 %v813, 127
    %v839 = vpop.permute.xlu0 %838
    %840 = vrot.lane.b32.xlu0 %v814, 127
    %v841 = vpop.permute.xlu0 %840
    %842 = vrot.lane.b32.xlu0 %v815, 127
    %v843 = vpop.permute.xlu0 %842
    %v844 = vsel %vm87, %v831, %v833
    %v845 = vsel %vm87, %v833, %v835
    %v846 = vsel %vm87, %v835, %v837
    %v847 = vsel %vm87, %v837, %v839
    %v848 = vsel %vm87, %v839, %v841
    %v849 = vsel %vm87, %v841, %v843
    %850 = vrot.lane.b32.xlu0 %v809, 126
    %v851 = vpop.permute.xlu0 %850
    %852 = vrot.lane.b32.xlu0 %v810, 126
    %v853 = vpop.permute.xlu0 %852
    %854 = vrot.lane.b32.xlu0 %v811, 126
    %v855 = vpop.permute.xlu0 %854
    %856 = vrot.lane.b32.xlu0 %v812, 126
    %v857 = vpop.permute.xlu0 %856
    %858 = vrot.lane.b32.xlu0 %v813, 126
    %v859 = vpop.permute.xlu0 %858
    %860 = vrot.lane.b32.xlu0 %v814, 126
    %v861 = vpop.permute.xlu0 %860
    %862 = vrot.lane.b32.xlu0 %v815, 126
    %v863 = vpop.permute.xlu0 %862
    %v864 = vsel %vm108, %v851, %v853
    %v865 = vsel %vm108, %v853, %v855
    %v866 = vsel %vm108, %v855, %v857
    %v867 = vsel %vm108, %v857, %v859
    %v868 = vsel %vm108, %v859, %v861
    %v869 = vsel %vm108, %v861, %v863
    %870 = vrot.lane.b32.xlu0 %v809, 110
    %v871 = vpop.permute.xlu0 %870
    %872 = vrot.lane.b32.xlu0 %v810, 110
    %v873 = vpop.permute.xlu0 %872
    %874 = vrot.lane.b32.xlu0 %v811, 110
    %v875 = vpop.permute.xlu0 %874
    %876 = vrot.lane.b32.xlu0 %v812, 110
    %v877 = vpop.permute.xlu0 %876
    %878 = vrot.lane.b32.xlu0 %v813, 110
    %v879 = vpop.permute.xlu0 %878
    %880 = vrot.lane.b32.xlu0 %v814, 110
    %v881 = vpop.permute.xlu0 %880
    %882 = vrot.lane.b32.xlu0 %v815, 110
    %v883 = vpop.permute.xlu0 %882
    %v884 = vsel %vm129, %v871, %v873
    %v885 = vsel %vm129, %v873, %v875
    %v886 = vsel %vm129, %v875, %v877
    %v887 = vsel %vm129, %v877, %v879
    %v888 = vsel %vm129, %v879, %v881
    %v889 = vsel %vm129, %v881, %v883
    %890 = vrot.lane.b32.xlu0 %v810, 109
    %v891 = vpop.permute.xlu0 %890
    %892 = vrot.lane.b32.xlu0 %v811, 109
    %v893 = vpop.permute.xlu0 %892
    %894 = vrot.lane.b32.xlu0 %v812, 109
    %v895 = vpop.permute.xlu0 %894
    %896 = vrot.lane.b32.xlu0 %v813, 109
    %v897 = vpop.permute.xlu0 %896
    %898 = vrot.lane.b32.xlu0 %v814, 109
    %v899 = vpop.permute.xlu0 %898
    %900 = vrot.lane.b32.xlu0 %v815, 109
    %v901 = vpop.permute.xlu0 %900
    %v902 = vsel %vm148, %v891, %v893
    %v903 = vsel %vm148, %v893, %v895
    %v904 = vsel %vm148, %v895, %v897
    %v905 = vsel %vm148, %v897, %v899
    %v906 = vsel %vm148, %v899, %v901
    %914 = vrot.lane.b32.xlu0 %v816, 108
    %v915 = vpop.permute.xlu0 %914
    %916 = vrot.lane.b32.xlu0 %v817, 108
    %v917 = vpop.permute.xlu0 %916
    %918 = vrot.lane.b32.xlu0 %v818, 108
    %v919 = vpop.permute.xlu0 %918
    %920 = vrot.lane.b32.xlu0 %v819, 108
    %v921 = vpop.permute.xlu0 %920
    %922 = vrot.lane.b32.xlu0 %v820, 108
    %v923 = vpop.permute.xlu0 %922
    %924 = vrot.lane.b32.xlu0 %v821, 108
    %v925 = vpop.permute.xlu0 %924
    %926 = vrot.lane.b32.xlu0 %v822, 108
    %v927 = vpop.permute.xlu0 %926
    %v928 = vsel %vm175, %v915, %v917
    %v929 = vsel %vm175, %v917, %v919
    %v930 = vsel %vm175, %v919, %v921
    %v931 = vsel %vm175, %v921, %v923
    %v932 = vsel %vm175, %v923, %v925
    %v933 = vsel %vm175, %v925, %v927
    %934 = vrot.lane.b32.xlu0 %v816, 92
    %v935 = vpop.permute.xlu0 %934
    %936 = vrot.lane.b32.xlu0 %v817, 92
    %v937 = vpop.permute.xlu0 %936
    %938 = vrot.lane.b32.xlu0 %v818, 92
    %v939 = vpop.permute.xlu0 %938
    %940 = vrot.lane.b32.xlu0 %v819, 92
    %v941 = vpop.permute.xlu0 %940
    %942 = vrot.lane.b32.xlu0 %v820, 92
    %v943 = vpop.permute.xlu0 %942
    %944 = vrot.lane.b32.xlu0 %v821, 92
    %v945 = vpop.permute.xlu0 %944
    %946 = vrot.lane.b32.xlu0 %v822, 92
    %v947 = vpop.permute.xlu0 %946
    %v948 = vsel %vm196, %v935, %v937
    %v949 = vsel %vm196, %v937, %v939
    %v950 = vsel %vm196, %v939, %v941
    %v951 = vsel %vm196, %v941, %v943
    %v952 = vsel %vm196, %v943, %v945
    %v953 = vsel %vm196, %v945, %v947
    %954 = vrot.lane.b32.xlu0 %v816, 91
    %v955 = vpop.permute.xlu0 %954
    %956 = vrot.lane.b32.xlu0 %v817, 91
    %v957 = vpop.permute.xlu0 %956
    %958 = vrot.lane.b32.xlu0 %v818, 91
    %v959 = vpop.permute.xlu0 %958
    %960 = vrot.lane.b32.xlu0 %v819, 91
    %v961 = vpop.permute.xlu0 %960
    %962 = vrot.lane.b32.xlu0 %v820, 91
    %v963 = vpop.permute.xlu0 %962
    %964 = vrot.lane.b32.xlu0 %v821, 91
    %v965 = vpop.permute.xlu0 %964
    %966 = vrot.lane.b32.xlu0 %v822, 91
    %v967 = vpop.permute.xlu0 %966
    %v968 = vsel %vm217, %v955, %v957
    %v969 = vsel %vm217, %v957, %v959
    %v970 = vsel %vm217, %v959, %v961
    %v971 = vsel %vm217, %v961, %v963
    %v972 = vsel %vm217, %v963, %v965
    %v973 = vsel %vm217, %v965, %v967
    %974 = vrot.lane.b32.xlu0 %v816, 90
    %v975 = vpop.permute.xlu0 %974
    %976 = vrot.lane.b32.xlu0 %v817, 90
    %v977 = vpop.permute.xlu0 %976
    %978 = vrot.lane.b32.xlu0 %v818, 90
    %v979 = vpop.permute.xlu0 %978
    %980 = vrot.lane.b32.xlu0 %v819, 90
    %v981 = vpop.permute.xlu0 %980
    %982 = vrot.lane.b32.xlu0 %v820, 90
    %v983 = vpop.permute.xlu0 %982
    %984 = vrot.lane.b32.xlu0 %v821, 90
    %v985 = vpop.permute.xlu0 %984
    %986 = vrot.lane.b32.xlu0 %v822, 90
    %v987 = vpop.permute.xlu0 %986
    %v988 = vsel %vm238, %v975, %v977
    %v989 = vsel %vm238, %v977, %v979
    %v990 = vsel %vm238, %v979, %v981
    %v991 = vsel %vm238, %v981, %v983
    %v992 = vsel %vm238, %v983, %v985
    %v993 = vsel %vm238, %v985, %v987
    %994 = vrot.lane.b32.xlu0 %v809, 19
    %v995 = vpop.permute.xlu0 %994
    %996 = vrot.lane.b32.xlu0 %v810, 19
    %v997 = vpop.permute.xlu0 %996
    %998 = vrot.lane.b32.xlu0 %v811, 19
    %v999 = vpop.permute.xlu0 %998
    %1000 = vrot.lane.b32.xlu0 %v812, 19
    %v1001 = vpop.permute.xlu0 %1000
    %1002 = vrot.lane.b32.xlu0 %v813, 19
    %v1003 = vpop.permute.xlu0 %1002
    %1004 = vrot.lane.b32.xlu0 %v814, 19
    %v1005 = vpop.permute.xlu0 %1004
    %1006 = vrot.lane.b32.xlu0 %v815, 19
    %v1007 = vpop.permute.xlu0 %1006
    %1008 = vrot.lane.b32.xlu0 %v844, 19
    %v1009 = vpop.permute.xlu0 %1008
    %1010 = vrot.lane.b32.xlu0 %v845, 19
    %v1011 = vpop.permute.xlu0 %1010
    %1012 = vrot.lane.b32.xlu0 %v846, 19
    %v1013 = vpop.permute.xlu0 %1012
    %1014 = vrot.lane.b32.xlu0 %v847, 19
    %v1015 = vpop.permute.xlu0 %1014
    %1016 = vrot.lane.b32.xlu0 %v848, 19
    %v1017 = vpop.permute.xlu0 %1016
    %1018 = vrot.lane.b32.xlu0 %v849, 19
    %v1019 = vpop.permute.xlu0 %1018
    %1020 = vrot.lane.b32.xlu0 %v843, 19
    %v1021 = vpop.permute.xlu0 %1020
    %1022 = vrot.lane.b32.xlu0 %v864, 19
    %v1023 = vpop.permute.xlu0 %1022
    %1024 = vrot.lane.b32.xlu0 %v865, 19
    %v1025 = vpop.permute.xlu0 %1024
    %1026 = vrot.lane.b32.xlu0 %v866, 19
    %v1027 = vpop.permute.xlu0 %1026
    %1028 = vrot.lane.b32.xlu0 %v867, 19
    %v1029 = vpop.permute.xlu0 %1028
    %1030 = vrot.lane.b32.xlu0 %v868, 19
    %v1031 = vpop.permute.xlu0 %1030
    %1032 = vrot.lane.b32.xlu0 %v869, 19
    %v1033 = vpop.permute.xlu0 %1032
    %1034 = vrot.lane.b32.xlu0 %v863, 19
    %v1035 = vpop.permute.xlu0 %1034
    %1036 = vrot.lane.b32.xlu0 %v884, 19
    %v1037 = vpop.permute.xlu0 %1036
    %1038 = vrot.lane.b32.xlu0 %v885, 19
    %v1039 = vpop.permute.xlu0 %1038
    %1040 = vrot.lane.b32.xlu0 %v886, 19
    %v1041 = vpop.permute.xlu0 %1040
    %1042 = vrot.lane.b32.xlu0 %v887, 19
    %v1043 = vpop.permute.xlu0 %1042
    %1044 = vrot.lane.b32.xlu0 %v888, 19
    %v1045 = vpop.permute.xlu0 %1044
    %1046 = vrot.lane.b32.xlu0 %v889, 19
    %v1047 = vpop.permute.xlu0 %1046
    %1048 = vrot.lane.b32.xlu0 %v883, 19
    %v1049 = vpop.permute.xlu0 %1048
    %1050 = vrot.lane.b32.xlu0 %v891, 19
    %v1051 = vpop.permute.xlu0 %1050
    %1052 = vrot.lane.b32.xlu0 %v902, 19
    %v1053 = vpop.permute.xlu0 %1052
    %1054 = vrot.lane.b32.xlu0 %v903, 19
    %v1055 = vpop.permute.xlu0 %1054
    %1056 = vrot.lane.b32.xlu0 %v904, 19
    %v1057 = vpop.permute.xlu0 %1056
    %1058 = vrot.lane.b32.xlu0 %v905, 19
    %v1059 = vpop.permute.xlu0 %1058
    %1060 = vrot.lane.b32.xlu0 %v906, 19
    %v1061 = vpop.permute.xlu0 %1060
    %1062 = vrot.lane.b32.xlu0 %v901, 19
    %v1063 = vpop.permute.xlu0 %1062
    %1064 = vrot.lane.b32.xlu0 %v915, 19
    %v1065 = vpop.permute.xlu0 %1064
    %1066 = vrot.lane.b32.xlu0 %v928, 19
    %v1067 = vpop.permute.xlu0 %1066
    %1068 = vrot.lane.b32.xlu0 %v929, 19
    %v1069 = vpop.permute.xlu0 %1068
    %1070 = vrot.lane.b32.xlu0 %v930, 19
    %v1071 = vpop.permute.xlu0 %1070
    %1072 = vrot.lane.b32.xlu0 %v931, 19
    %v1073 = vpop.permute.xlu0 %1072
    %1074 = vrot.lane.b32.xlu0 %v932, 19
    %v1075 = vpop.permute.xlu0 %1074
    %1076 = vrot.lane.b32.xlu0 %v933, 19
    %v1077 = vpop.permute.xlu0 %1076
    %1078 = vrot.lane.b32.xlu0 %v935, 19
    %v1079 = vpop.permute.xlu0 %1078
    %1080 = vrot.lane.b32.xlu0 %v948, 19
    %v1081 = vpop.permute.xlu0 %1080
    %1082 = vrot.lane.b32.xlu0 %v949, 19
    %v1083 = vpop.permute.xlu0 %1082
    %1084 = vrot.lane.b32.xlu0 %v950, 19
    %v1085 = vpop.permute.xlu0 %1084
    %1086 = vrot.lane.b32.xlu0 %v951, 19
    %v1087 = vpop.permute.xlu0 %1086
    %1088 = vrot.lane.b32.xlu0 %v952, 19
    %v1089 = vpop.permute.xlu0 %1088
    %1090 = vrot.lane.b32.xlu0 %v953, 19
    %v1091 = vpop.permute.xlu0 %1090
    %1092 = vrot.lane.b32.xlu0 %v955, 19
    %v1093 = vpop.permute.xlu0 %1092
    %1094 = vrot.lane.b32.xlu0 %v968, 19
    %v1095 = vpop.permute.xlu0 %1094
    %1096 = vrot.lane.b32.xlu0 %v969, 19
    %v1097 = vpop.permute.xlu0 %1096
    %1098 = vrot.lane.b32.xlu0 %v970, 19
    %v1099 = vpop.permute.xlu0 %1098
    %1100 = vrot.lane.b32.xlu0 %v971, 19
    %v1101 = vpop.permute.xlu0 %1100
    %1102 = vrot.lane.b32.xlu0 %v972, 19
    %v1103 = vpop.permute.xlu0 %1102
    %1104 = vrot.lane.b32.xlu0 %v973, 19
    %v1105 = vpop.permute.xlu0 %1104
    %1106 = vrot.lane.b32.xlu0 %v975, 19
    %v1107 = vpop.permute.xlu0 %1106
    %1108 = vrot.lane.b32.xlu0 %v988, 19
    %v1109 = vpop.permute.xlu0 %1108
    %1110 = vrot.lane.b32.xlu0 %v989, 19
    %v1111 = vpop.permute.xlu0 %1110
    %1112 = vrot.lane.b32.xlu0 %v990, 19
    %v1113 = vpop.permute.xlu0 %1112
    %1114 = vrot.lane.b32.xlu0 %v991, 19
    %v1115 = vpop.permute.xlu0 %1114
    %1116 = vrot.lane.b32.xlu0 %v992, 19
    %v1117 = vpop.permute.xlu0 %1116
    %1118 = vrot.lane.b32.xlu0 %v993, 19
    %v1119 = vpop.permute.xlu0 %1118
    %v1120 = vsel %vm372, %v995, %v997
    %v1121 = vsel %vm372, %v997, %v999
    %v1122 = vsel %vm372, %v999, %v1001
    %v1123 = vsel %vm372, %v1001, %v1003
    %v1124 = vsel %vm372, %v1003, %v1005
    %v1125 = vsel %vm372, %v1005, %v1007
    %v1126 = vsel %vm372, %v1009, %v1011
    %v1127 = vsel %vm372, %v1011, %v1013
    %v1128 = vsel %vm372, %v1013, %v1015
    %v1129 = vsel %vm372, %v1015, %v1017
    %v1130 = vsel %vm372, %v1017, %v1019
    %v1131 = vsel %vm372, %v1019, %v1021
    %v1132 = vsel %vm372, %v1023, %v1025
    %v1133 = vsel %vm372, %v1025, %v1027
    %v1134 = vsel %vm372, %v1027, %v1029
    %v1135 = vsel %vm372, %v1029, %v1031
    %v1136 = vsel %vm372, %v1031, %v1033
    %v1137 = vsel %vm372, %v1033, %v1035
    %v1138 = vsel %vm372, %v1037, %v1039
    %v1139 = vsel %vm372, %v1039, %v1041
    %v1140 = vsel %vm372, %v1041, %v1043
    %v1141 = vsel %vm372, %v1043, %v1045
    %v1142 = vsel %vm372, %v1045, %v1047
    %v1143 = vsel %vm372, %v1047, %v1049
    %v1144 = vsel %vm372, %v1051, %v1053
    %v1145 = vsel %vm372, %v1053, %v1055
    %v1146 = vsel %vm372, %v1055, %v1057
    %v1147 = vsel %vm372, %v1057, %v1059
    %v1148 = vsel %vm372, %v1059, %v1061
    %v1149 = vsel %vm372, %v1061, %v1063
    %v1150 = vsel %vm372, %v1065, %v1067
    %v1151 = vsel %vm372, %v1067, %v1069
    %v1152 = vsel %vm372, %v1069, %v1071
    %v1153 = vsel %vm372, %v1071, %v1073
    %v1154 = vsel %vm372, %v1073, %v1075
    %v1155 = vsel %vm372, %v1075, %v1077
    %v1156 = vsel %vm372, %v1079, %v1081
    %v1157 = vsel %vm372, %v1081, %v1083
    %v1158 = vsel %vm372, %v1083, %v1085
    %v1159 = vsel %vm372, %v1085, %v1087
    %v1160 = vsel %vm372, %v1087, %v1089
    %v1161 = vsel %vm372, %v1089, %v1091
    %v1162 = vsel %vm372, %v1093, %v1095
    %v1163 = vsel %vm372, %v1095, %v1097
    %v1164 = vsel %vm372, %v1097, %v1099
    %v1165 = vsel %vm372, %v1099, %v1101
    %v1166 = vsel %vm372, %v1101, %v1103
    %v1167 = vsel %vm372, %v1103, %v1105
    %v1168 = vsel %vm372, %v1107, %v1109
    %v1169 = vsel %vm372, %v1109, %v1111
    %v1170 = vsel %vm372, %v1111, %v1113
    %v1171 = vsel %vm372, %v1113, %v1115
    %v1172 = vsel %vm372, %v1115, %v1117
    %v1173 = vsel %vm372, %v1117, %v1119
    %v1229 = vsel %vm481, %v808, 0
    %1231 = vmatprep.subr.mxu0 %v1121
    %1232 = vmatpush1.msra.mxu0 %v1120
    %1233 = vmatprep.subr.mxu0 %v1127
    %1234 = vmatpush1.msra.mxu0 %v1126
    %1235 = vmatprep.subr.mxu0 %v1133
    %1236 = vmatpush1.msra.mxu0 %v1132
    %1237 = vmatprep.subr.mxu0 %v1139
    %1238 = vmatpush1.msra.mxu0 %v1138
    %1239 = vmatprep.subr.mxu0 %v1145
    %1240 = vmatpush1.msra.mxu0 %v1144
    %1241 = vmatprep.subr.mxu0 %v1151
    %1242 = vmatpush1.msra.mxu0 %v1150
    %1243 = vmatprep.subr.mxu0 %v1157
    %1244 = vmatpush1.msra.mxu0 %v1156
    %1245 = vmatprep.subr.mxu0 %v1163
    %1246 = vmatpush1.msra.mxu0 %v1162
    %1247 = vmatprep.subr.mxu0 %v1169
    %1248 = vmatpush1.msra.mxu0 %v1168
    %1249 = vmatprep.subr.mxu0 0.0
    %1250 = vmatpush1.msra.mxu0 0.0
    %1251 = vmatprep.subr.mxu0 0.0
    %1252 = vmatpush1.msra.mxu0 0.0
    %1253 = vmatprep.subr.mxu0 0.0
    %1254 = vmatpush1.msra.mxu0 0.0
    %1255 = vmatprep.subr.mxu0 0.0
    %1256 = vmatpush1.msra.mxu0 0.0
    %1257 = vmatprep.subr.mxu0 0.0
    %1258 = vmatpush1.msra.mxu0 0.0
    %1259 = vmatprep.subr.mxu0 0.0
    %1260 = vmatpush1.msra.mxu0 0.0
    %1261 = vmatprep.subr.mxu0 0.0
    %1262 = vmatpush1.msra.mxu0 0.0
    %1263 = vmatprep.subr.mxu0 0.0
    %1264 = vmatpush1.msra.mxu0 0.0
    %1265 = vmatprep.subr.mxu0 0.0
    %1266 = vmatpush1.msra.mxu0 0.0
    %1267 = vmatprep.subr.mxu0 0.0
    %1268 = vmatpush1.msra.mxu0 0.0
    %1269 = vmatprep.subr.mxu0 0.0
    %1270 = vmatpush1.msra.mxu0 0.0
    %1271 = vmatprep.subr.mxu0 0.0
    %1272 = vmatpush1.msra.mxu0 0.0
    %1273 = vmatprep.subr.mxu0 0.0
    %1274 = vmatpush1.msra.mxu0 0.0
    %1275 = vmatprep.subr.mxu0 0.0
    %1276 = vmatpush1.msra.mxu0 0.0
    %1277 = vmatprep.subr.mxu0 0.0
    %1278 = vmatpush1.msra.mxu0 0.0
    %1279 = vmatprep.subr.mxu0 0.0
    %1280 = vmatpush1.msra.mxu0 0.0
    %1281 = vmatprep.subr.mxu0 0.0
    %1282 = vmatpush1.msra.mxu0 0.0
    %1283 = vmatprep.subr.mxu0 0.0
    %1284 = vmatpush1.msra.mxu0 0.0
    %1285 = vmatprep.subr.mxu0 0.0
    %1286 = vmatpush1.msra.mxu0 0.0
    %1287 = vmatprep.subr.mxu0 0.0
    %1288 = vmatpush1.msra.mxu0 0.0
    %1289 = vmatprep.subr.mxu0 0.0
    %1290 = vmatpush1.msra.mxu0 0.0
    %1291 = vmatprep.subr.mxu0 0.0
    %1292 = vmatpush1.msra.mxu0 0.0
    %1293 = vmatprep.subr.mxu0 0.0
    %1294 = vmatpush1.msra.mxu0 0.0
    %1295 = vmatprep.mubr.f32.mxu0 0.0
    %1296 = vmatmul.mubr.f32.gmra.mrb[0].mxu0 %v1229
    %v1297 = vpop.f32.mrb[0].mxu0
    %v1298 = vadd.f32 0.0, %v1297
    %v1299 = vpop.f32.mrb[0].mxu0
    %v1300 = vadd.f32 0.0, %v1299
    %1301 = vdwg.mxu0
    %1302 = vmatprep.subr.mxu0 %v1123
    %1303 = vmatpush1.msra.mxu0 %v1122
    %1304 = vmatprep.subr.mxu0 %v1129
    %1305 = vmatpush1.msra.mxu0 %v1128
    %1306 = vmatprep.subr.mxu0 %v1135
    %1307 = vmatpush1.msra.mxu0 %v1134
    %1308 = vmatprep.subr.mxu0 %v1141
    %1309 = vmatpush1.msra.mxu0 %v1140
    %1310 = vmatprep.subr.mxu0 %v1147
    %1311 = vmatpush1.msra.mxu0 %v1146
    %1312 = vmatprep.subr.mxu0 %v1153
    %1313 = vmatpush1.msra.mxu0 %v1152
    %1314 = vmatprep.subr.mxu0 %v1159
    %1315 = vmatpush1.msra.mxu0 %v1158
    %1316 = vmatprep.subr.mxu0 %v1165
    %1317 = vmatpush1.msra.mxu0 %v1164
    %1318 = vmatprep.subr.mxu0 %v1171
    %1319 = vmatpush1.msra.mxu0 %v1170
    %1320 = vmatprep.subr.mxu0 0.0
    %1321 = vmatpush1.msra.mxu0 0.0
    %1322 = vmatprep.subr.mxu0 0.0
    %1323 = vmatpush1.msra.mxu0 0.0
    %1324 = vmatprep.subr.mxu0 0.0
    %1325 = vmatpush1.msra.mxu0 0.0
    %1326 = vmatprep.subr.mxu0 0.0
    %1327 = vmatpush1.msra.mxu0 0.0
    %1328 = vmatprep.subr.mxu0 0.0
    %1329 = vmatpush1.msra.mxu0 0.0
    %1330 = vmatprep.subr.mxu0 0.0
    %1331 = vmatpush1.msra.mxu0 0.0
    %1332 = vmatprep.subr.mxu0 0.0
    %1333 = vmatpush1.msra.mxu0 0.0
    %1334 = vmatprep.subr.mxu0 0.0
    %1335 = vmatpush1.msra.mxu0 0.0
    %1336 = vmatprep.subr.mxu0 0.0
    %1337 = vmatpush1.msra.mxu0 0.0
    %1338 = vmatprep.subr.mxu0 0.0
    %1339 = vmatpush1.msra.mxu0 0.0
    %1340 = vmatprep.subr.mxu0 0.0
    %1341 = vmatpush1.msra.mxu0 0.0
    %1342 = vmatprep.subr.mxu0 0.0
    %1343 = vmatpush1.msra.mxu0 0.0
    %1344 = vmatprep.subr.mxu0 0.0
    %1345 = vmatpush1.msra.mxu0 0.0
    %1346 = vmatprep.subr.mxu0 0.0
    %1347 = vmatpush1.msra.mxu0 0.0
    %1348 = vmatprep.subr.mxu0 0.0
    %1349 = vmatpush1.msra.mxu0 0.0
    %1350 = vmatprep.subr.mxu0 0.0
    %1351 = vmatpush1.msra.mxu0 0.0
    %1352 = vmatprep.subr.mxu0 0.0
    %1353 = vmatpush1.msra.mxu0 0.0
    %1354 = vmatprep.subr.mxu0 0.0
    %1355 = vmatpush1.msra.mxu0 0.0
    %1356 = vmatprep.subr.mxu0 0.0
    %1357 = vmatpush1.msra.mxu0 0.0
    %1358 = vmatprep.subr.mxu0 0.0
    %1359 = vmatpush1.msra.mxu0 0.0
    %1360 = vmatprep.subr.mxu0 0.0
    %1361 = vmatpush1.msra.mxu0 0.0
    %1362 = vmatprep.subr.mxu0 0.0
    %1363 = vmatpush1.msra.mxu0 0.0
    %1364 = vmatprep.subr.mxu0 0.0
    %1365 = vmatpush1.msra.mxu0 0.0
    %1366 = vmatprep.mubr.f32.mxu0 0.0
    %1367 = vmatmul.mubr.f32.gmra.mrb[0].mxu0 %v1229
    %v1368 = vpop.f32.mrb[0].mxu0
    %v1369 = vadd.f32 0.0, %v1368
    %v1370 = vpop.f32.mrb[0].mxu0
    %v1371 = vadd.f32 0.0, %v1370
    %1372 = vdwg.mxu0
    %1373 = vmatprep.subr.mxu0 %v1125
    %1374 = vmatpush1.msra.mxu0 %v1124
    %1375 = vmatprep.subr.mxu0 %v1131
    %1376 = vmatpush1.msra.mxu0 %v1130
    %1377 = vmatprep.subr.mxu0 %v1137
    %1378 = vmatpush1.msra.mxu0 %v1136
    %1379 = vmatprep.subr.mxu0 %v1143
    %1380 = vmatpush1.msra.mxu0 %v1142
    %1381 = vmatprep.subr.mxu0 %v1149
    %1382 = vmatpush1.msra.mxu0 %v1148
    %1383 = vmatprep.subr.mxu0 %v1155
    %1384 = vmatpush1.msra.mxu0 %v1154
    %1385 = vmatprep.subr.mxu0 %v1161
    %1386 = vmatpush1.msra.mxu0 %v1160
    %1387 = vmatprep.subr.mxu0 %v1167
    %1388 = vmatpush1.msra.mxu0 %v1166
    %1389 = vmatprep.subr.mxu0 %v1173
    %1390 = vmatpush1.msra.mxu0 %v1172
    %1391 = vmatprep.subr.mxu0 0.0
    %1392 = vmatpush1.msra.mxu0 0.0
    %1393 = vmatprep.subr.mxu0 0.0
    %1394 = vmatpush1.msra.mxu0 0.0
    %1395 = vmatprep.subr.mxu0 0.0
    %1396 = vmatpush1.msra.mxu0 0.0
    %1397 = vmatprep.subr.mxu0 0.0
    %1398 = vmatpush1.msra.mxu0 0.0
    %1399 = vmatprep.subr.mxu0 0.0
    %1400 = vmatpush1.msra.mxu0 0.0
    %1401 = vmatprep.subr.mxu0 0.0
    %1402 = vmatpush1.msra.mxu0 0.0
    %1403 = vmatprep.subr.mxu0 0.0
    %1404 = vmatpush1.msra.mxu0 0.0
    %1405 = vmatprep.subr.mxu0 0.0
    %1406 = vmatpush1.msra.mxu0 0.0
    %1407 = vmatprep.subr.mxu0 0.0
    %1408 = vmatpush1.msra.mxu0 0.0
    %1409 = vmatprep.subr.mxu0 0.0
    %1410 = vmatpush1.msra.mxu0 0.0
    %1411 = vmatprep.subr.mxu0 0.0
    %1412 = vmatpush1.msra.mxu0 0.0
    %1413 = vmatprep.subr.mxu0 0.0
    %1414 = vmatpush1.msra.mxu0 0.0
    %1415 = vmatprep.subr.mxu0 0.0
    %1416 = vmatpush1.msra.mxu0 0.0
    %1417 = vmatprep.subr.mxu0 0.0
    %1418 = vmatpush1.msra.mxu0 0.0
    %1419 = vmatprep.subr.mxu0 0.0
    %1420 = vmatpush1.msra.mxu0 0.0
    %1421 = vmatprep.subr.mxu0 0.0
    %1422 = vmatpush1.msra.mxu0 0.0
    %1423 = vmatprep.subr.mxu0 0.0
    %1424 = vmatpush1.msra.mxu0 0.0
    %1425 = vmatprep.subr.mxu0 0.0
    %1426 = vmatpush1.msra.mxu0 0.0
    %1427 = vmatprep.subr.mxu0 0.0
    %1428 = vmatpush1.msra.mxu0 0.0
    %1429 = vmatprep.subr.mxu0 0.0
    %1430 = vmatpush1.msra.mxu0 0.0
    %1431 = vmatprep.subr.mxu0 0.0
    %1432 = vmatpush1.msra.mxu0 0.0
    %1433 = vmatprep.subr.mxu0 0.0
    %1434 = vmatpush1.msra.mxu0 0.0
    %1435 = vmatprep.subr.mxu0 0.0
    %1436 = vmatpush1.msra.mxu0 0.0
    %1437 = vmatprep.mubr.f32.mxu0 0.0
    %1438 = vmatmul.mubr.f32.gmra.mrb[0].mxu0 %v1229
    %v1439 = vpop.f32.mrb[0].mxu0
    %v1440 = vadd.f32 0.0, %v1439
    %v1441 = vpop.f32.mrb[0].mxu0
    %v1442 = vadd.f32 0.0, %v1441
    %1443 = vdwg.mxu0
    %v1444 = vld [vmem:[%s6] sm:$0xff]
    %v1445 = vld [vmem:[%s7] sm:$0xff]
    %v1446 = vmul.f32 %v1298, %v704
    %v1447 = vmul.f32 %v1300, %v708
    %v1448 = vmul.f32 %v1369, %v712
    %v1449 = vmul.f32 %v1371, %v716
    %v1450 = vmul.f32 %v1440, %v720
    %v1451 = vmul.f32 %v1442, %v724
    %v1452 = vadd.f32 %v1446, %v1447
    %v1453 = vadd.f32 %v1452, %v1448
    %v1454 = vadd.f32 %v1453, %v1449
    %v1455 = vadd.f32 %v1454, %v1450
    %v1456 = vadd.f32 %v1455, %v1451
    %1457 = vadd.xlane.f32.xlu0 %v1456
    %v1458 = vpop.xlane.xlu0 %1457
    %v1459 = vmul.f32 %v1446, %v1446
    %v1460 = vmul.f32 %v1447, %v1447
    %v1461 = vmul.f32 %v1448, %v1448
    %v1462 = vmul.f32 %v1449, %v1449
    %v1463 = vmul.f32 %v1450, %v1450
    %v1464 = vmul.f32 %v1451, %v1451
    %v1465 = vadd.f32 %v1459, %v1460
    %v1466 = vadd.f32 %v1465, %v1461
    %v1467 = vadd.f32 %v1466, %v1462
    %v1468 = vadd.f32 %v1467, %v1463
    %v1469 = vadd.f32 %v1468, %v1464
    %1470 = vadd.xlane.f32.xlu0 %v1469
    %v1471 = vpop.xlane.xlu0 %1470
    %v1472 = vmul.f32 %v1458, 0.001953125
    %v1473 = vmul.f32 %v1471, 0.001953125
    %v1474 = vmul.f32 %v1472, %v1472
    %v1475 = vsub.f32 %v1473, %v1474
    %v1476 = vadd.f32 %v1475, 1e-05
    %v1477 = vrsqrt.pop %v1476
    %v1478 = vmul.f32 %v1444, %v1477
    %v1479 = vmul.f32 %v1472, %v1478
    %v1480 = vsub.f32 %v1445, %v1479
    %1482 = vset.pattern.permute.xlu0 0
    %1483 = vperm.xlu0 %1482, %v1478
    %v1484 = vpop.permute.xlu0 %1483
    %v1486 = vmul.f32 %v1298, %v1484
    %v1487 = vmul.f32 %v1300, %v1484
    %v1488 = vmul.f32 %v1369, %v1484
    %v1489 = vmul.f32 %v1371, %v1484
    %v1490 = vmul.f32 %v1440, %v1484
    %v1491 = vmul.f32 %v1442, %v1484
    %1493 = vset.pattern.permute.xlu0 0
    %1494 = vperm.xlu0 %1493, %v1480
    %v1495 = vpop.permute.xlu0 %1494
    %v1497 = vadd.f32 %v1486, %v1495
    %v1498 = vadd.f32 %v1487, %v1495
    %v1499 = vadd.f32 %v1488, %v1495
    %v1500 = vadd.f32 %v1489, %v1495
    %v1501 = vadd.f32 %v1490, %v1495
    %v1502 = vadd.f32 %v1491, %v1495
    %v1503 = vld [vmem:[#allocation3 + $0x8] sm:$0xff]
    %v1504 = vld [vmem:[#allocation3 + $0x10] sm:$0xff]
    %v1505 = vld [vmem:[#allocation3 + $0x18] sm:$0xff]
    %v1506 = vld [vmem:[#allocation3 + $0x20] sm:$0xff]
    %v1507 = vld [vmem:[#allocation3 + $0x28] sm:$0xff]
    %v1508 = vld [vmem:[#allocation3 + $0x30] sm:$0xff]
    %v1509 = vld [vmem:[%s8] sm:$0xff]
    %vm1510 = vcmask 64512
    %v1512 = vsel %vm1510, %v1509, 0
    %1514 = vmatprep.subr.mxu0 %v1504
    %1515 = vmatpush1.msra.mxu0 %v1503
    %1516 = vmatprep.subr.mxu0 0.0
    %1517 = vmatpush1.msra.mxu0 0.0
    %1518 = vmatprep.subr.mxu0 0.0
    %1519 = vmatpush1.msra.mxu0 0.0
    %1520 = vmatprep.subr.mxu0 0.0
    %1521 = vmatpush1.msra.mxu0 0.0
    %1522 = vmatprep.subr.mxu0 0.0
    %1523 = vmatpush1.msra.mxu0 0.0
    %1524 = vmatprep.subr.mxu0 0.0
    %1525 = vmatpush1.msra.mxu0 0.0
    %1526 = vmatprep.subr.mxu0 0.0
    %1527 = vmatpush1.msra.mxu0 0.0
    %1528 = vmatprep.subr.mxu0 0.0
    %1529 = vmatpush1.msra.mxu0 0.0
    %1530 = vmatprep.subr.mxu0 0.0
    %1531 = vmatpush1.msra.mxu0 0.0
    %1532 = vmatprep.subr.mxu0 0.0
    %1533 = vmatpush1.msra.mxu0 0.0
    %1534 = vmatprep.subr.mxu0 0.0
    %1535 = vmatpush1.msra.mxu0 0.0
    %1536 = vmatprep.subr.mxu0 0.0
    %1537 = vmatpush1.msra.mxu0 0.0
    %1538 = vmatprep.subr.mxu0 0.0
    %1539 = vmatpush1.msra.mxu0 0.0
    %1540 = vmatprep.subr.mxu0 0.0
    %1541 = vmatpush1.msra.mxu0 0.0
    %1542 = vmatprep.subr.mxu0 0.0
    %1543 = vmatpush1.msra.mxu0 0.0
    %1544 = vmatprep.subr.mxu0 0.0
    %1545 = vmatpush1.msra.mxu0 0.0
    %1546 = vmatprep.subr.mxu0 0.0
    %1547 = vmatpush1.msra.mxu0 0.0
    %1548 = vmatprep.subr.mxu0 0.0
    %1549 = vmatpush1.msra.mxu0 0.0
    %1550 = vmatprep.subr.mxu0 0.0
    %1551 = vmatpush1.msra.mxu0 0.0
    %1552 = vmatprep.subr.mxu0 0.0
    %1553 = vmatpush1.msra.mxu0 0.0
    %1554 = vmatprep.subr.mxu0 0.0
    %1555 = vmatpush1.msra.mxu0 0.0
    %1556 = vmatprep.subr.mxu0 0.0
    %1557 = vmatpush1.msra.mxu0 0.0
    %1558 = vmatprep.subr.mxu0 0.0
    %1559 = vmatpush1.msra.mxu0 0.0
    %1560 = vmatprep.subr.mxu0 0.0
    %1561 = vmatpush1.msra.mxu0 0.0
    %1562 = vmatprep.subr.mxu0 0.0
    %1563 = vmatpush1.msra.mxu0 0.0
    %1564 = vmatprep.subr.mxu0 0.0
    %1565 = vmatpush1.msra.mxu0 0.0
    %1566 = vmatprep.subr.mxu0 0.0
    %1567 = vmatpush1.msra.mxu0 0.0
    %1568 = vmatprep.subr.mxu0 0.0
    %1569 = vmatpush1.msra.mxu0 0.0
    %1570 = vmatprep.subr.mxu0 0.0
    %1571 = vmatpush1.msra.mxu0 0.0
    %1572 = vmatprep.subr.mxu0 0.0
    %1573 = vmatpush1.msra.mxu0 0.0
    %1574 = vmatprep.subr.mxu0 0.0
    %1575 = vmatpush1.msra.mxu0 0.0
    %1576 = vmatprep.subr.mxu0 0.0
    %1577 = vmatpush1.msra.mxu0 0.0
    %1578 = vmatprep.mubr.f32.mxu0 0.0
    %1579 = vmatmul.mubr.f32.gmra.mrb[0].mxu0 %v1512
    %v1580 = vpop.f32.mrb[0].mxu0
    %v1581 = vadd.f32 0.0, %v1580
    %v1582 = vpop.f32.mrb[0].mxu0
    %v1583 = vadd.f32 0.0, %v1582
    %1584 = vdwg.mxu0
    %1585 = vmatprep.subr.mxu0 %v1506
    %1586 = vmatpush1.msra.mxu0 %v1505
    %1587 = vmatprep.subr.mxu0 0.0
    %1588 = vmatpush1.msra.mxu0 0.0
    %1589 = vmatprep.subr.mxu0 0.0
    %1590 = vmatpush1.msra.mxu0 0.0
    %1591 = vmatprep.subr.mxu0 0.0
    %1592 = vmatpush1.msra.mxu0 0.0
    %1593 = vmatprep.subr.mxu0 0.0
    %1594 = vmatpush1.msra.mxu0 0.0
    %1595 = vmatprep.subr.mxu0 0.0
    %1596 = vmatpush1.msra.mxu0 0.0
    %1597 = vmatprep.subr.mxu0 0.0
    %1598 = vmatpush1.msra.mxu0 0.0
    %1599 = vmatprep.subr.mxu0 0.0
    %1600 = vmatpush1.msra.mxu0 0.0
    %1601 = vmatprep.subr.mxu0 0.0
    %1602 = vmatpush1.msra.mxu0 0.0
    %1603 = vmatprep.subr.mxu0 0.0
    %1604 = vmatpush1.msra.mxu0 0.0
    %1605 = vmatprep.subr.mxu0 0.0
    %1606 = vmatpush1.msra.mxu0 0.0
    %1607 = vmatprep.subr.mxu0 0.0
    %1608 = vmatpush1.msra.mxu0 0.0
    %1609 = vmatprep.subr.mxu0 0.0
    %1610 = vmatpush1.msra.mxu0 0.0
    %1611 = vmatprep.subr.mxu0 0.0
    %1612 = vmatpush1.msra.mxu0 0.0
    %1613 = vmatprep.subr.mxu0 0.0
    %1614 = vmatpush1.msra.mxu0 0.0
    %1615 = vmatprep.subr.mxu0 0.0
    %1616 = vmatpush1.msra.mxu0 0.0
    %1617 = vmatprep.subr.mxu0 0.0
    %1618 = vmatpush1.msra.mxu0 0.0
    %1619 = vmatprep.subr.mxu0 0.0
    %1620 = vmatpush1.msra.mxu0 0.0
    %1621 = vmatprep.subr.mxu0 0.0
    %1622 = vmatpush1.msra.mxu0 0.0
    %1623 = vmatprep.subr.mxu0 0.0
    %1624 = vmatpush1.msra.mxu0 0.0
    %1625 = vmatprep.subr.mxu0 0.0
    %1626 = vmatpush1.msra.mxu0 0.0
    %1627 = vmatprep.subr.mxu0 0.0
    %1628 = vmatpush1.msra.mxu0 0.0
    %1629 = vmatprep.subr.mxu0 0.0
    %1630 = vmatpush1.msra.mxu0 0.0
    %1631 = vmatprep.subr.mxu0 0.0
    %1632 = vmatpush1.msra.mxu0 0.0
    %1633 = vmatprep.subr.mxu0 0.0
    %1634 = vmatpush1.msra.mxu0 0.0
    %1635 = vmatprep.subr.mxu0 0.0
    %1636 = vmatpush1.msra.mxu0 0.0
    %1637 = vmatprep.subr.mxu0 0.0
    %1638 = vmatpush1.msra.mxu0 0.0
    %1639 = vmatprep.subr.mxu0 0.0
    %1640 = vmatpush1.msra.mxu0 0.0
    %1641 = vmatprep.subr.mxu0 0.0
    %1642 = vmatpush1.msra.mxu0 0.0
    %1643 = vmatprep.subr.mxu0 0.0
    %1644 = vmatpush1.msra.mxu0 0.0
    %1645 = vmatprep.subr.mxu0 0.0
    %1646 = vmatpush1.msra.mxu0 0.0
    %1647 = vmatprep.subr.mxu0 0.0
    %1648 = vmatpush1.msra.mxu0 0.0
    %1649 = vmatprep.mubr.f32.mxu0 0.0
    %1650 = vmatmul.mubr.f32.gmra.mrb[0].mxu0 %v1512
    %v1651 = vpop.f32.mrb[0].mxu0
    %v1652 = vadd.f32 0.0, %v1651
    %v1653 = vpop.f32.mrb[0].mxu0
    %v1654 = vadd.f32 0.0, %v1653
    %1655 = vdwg.mxu0
    %1656 = vmatprep.subr.mxu0 %v1508
    %1657 = vmatpush1.msra.mxu0 %v1507
    %1658 = vmatprep.subr.mxu0 0.0
    %1659 = vmatpush1.msra.mxu0 0.0
    %1660 = vmatprep.subr.mxu0 0.0
    %1661 = vmatpush1.msra.mxu0 0.0
    %1662 = vmatprep.subr.mxu0 0.0
    %1663 = vmatpush1.msra.mxu0 0.0
    %1664 = vmatprep.subr.mxu0 0.0
    %1665 = vmatpush1.msra.mxu0 0.0
    %1666 = vmatprep.subr.mxu0 0.0
    %1667 = vmatpush1.msra.mxu0 0.0
    %1668 = vmatprep.subr.mxu0 0.0
    %1669 = vmatpush1.msra.mxu0 0.0
    %1670 = vmatprep.subr.mxu0 0.0
    %1671 = vmatpush1.msra.mxu0 0.0
    %1672 = vmatprep.subr.mxu0 0.0
    %1673 = vmatpush1.msra.mxu0 0.0
    %1674 = vmatprep.subr.mxu0 0.0
    %1675 = vmatpush1.msra.mxu0 0.0
    %1676 = vmatprep.subr.mxu0 0.0
    %1677 = vmatpush1.msra.mxu0 0.0
    %1678 = vmatprep.subr.mxu0 0.0
    %1679 = vmatpush1.msra.mxu0 0.0
    %1680 = vmatprep.subr.mxu0 0.0
    %1681 = vmatpush1.msra.mxu0 0.0
    %1682 = vmatprep.subr.mxu0 0.0
    %1683 = vmatpush1.msra.mxu0 0.0
    %1684 = vmatprep.subr.mxu0 0.0
    %1685 = vmatpush1.msra.mxu0 0.0
    %1686 = vmatprep.subr.mxu0 0.0
    %1687 = vmatpush1.msra.mxu0 0.0
    %1688 = vmatprep.subr.mxu0 0.0
    %1689 = vmatpush1.msra.mxu0 0.0
    %1690 = vmatprep.subr.mxu0 0.0
    %1691 = vmatpush1.msra.mxu0 0.0
    %1692 = vmatprep.subr.mxu0 0.0
    %1693 = vmatpush1.msra.mxu0 0.0
    %1694 = vmatprep.subr.mxu0 0.0
    %1695 = vmatpush1.msra.mxu0 0.0
    %1696 = vmatprep.subr.mxu0 0.0
    %1697 = vmatpush1.msra.mxu0 0.0
    %1698 = vmatprep.subr.mxu0 0.0
    %1699 = vmatpush1.msra.mxu0 0.0
    %1700 = vmatprep.subr.mxu0 0.0
    %1701 = vmatpush1.msra.mxu0 0.0
    %1702 = vmatprep.subr.mxu0 0.0
    %1703 = vmatpush1.msra.mxu0 0.0
    %1704 = vmatprep.subr.mxu0 0.0
    %1705 = vmatpush1.msra.mxu0 0.0
    %1706 = vmatprep.subr.mxu0 0.0
    %1707 = vmatpush1.msra.mxu0 0.0
    %1708 = vmatprep.subr.mxu0 0.0
    %1709 = vmatpush1.msra.mxu0 0.0
    %1710 = vmatprep.subr.mxu0 0.0
    %1711 = vmatpush1.msra.mxu0 0.0
    %1712 = vmatprep.subr.mxu0 0.0
    %1713 = vmatpush1.msra.mxu0 0.0
    %1714 = vmatprep.subr.mxu0 0.0
    %1715 = vmatpush1.msra.mxu0 0.0
    %1716 = vmatprep.subr.mxu0 0.0
    %1717 = vmatpush1.msra.mxu0 0.0
    %1718 = vmatprep.subr.mxu0 0.0
    %1719 = vmatpush1.msra.mxu0 0.0
    %1720 = vmatprep.mubr.f32.mxu0 0.0
    %1721 = vmatmul.mubr.f32.gmra.mrb[0].mxu0 %v1512
    %v1722 = vpop.f32.mrb[0].mxu0
    %v1723 = vadd.f32 0.0, %v1722
    %v1724 = vpop.f32.mrb[0].mxu0
    %v1725 = vadd.f32 0.0, %v1724
    %1726 = vdwg.mxu0
    %v1727 = vld [vmem:[%s9] sm:$0xff]
    %v1728 = vld [vmem:[%s10] sm:$0xff]
    %v1729 = vmul.f32 %v1581, %v704
    %v1730 = vmul.f32 %v1583, %v708
    %v1731 = vmul.f32 %v1652, %v712
    %v1732 = vmul.f32 %v1654, %v716
    %v1733 = vmul.f32 %v1723, %v720
    %v1734 = vmul.f32 %v1725, %v724
    %v1735 = vadd.f32 %v1729, %v1730
    %v1736 = vadd.f32 %v1735, %v1731
    %v1737 = vadd.f32 %v1736, %v1732
    %v1738 = vadd.f32 %v1737, %v1733
    %v1739 = vadd.f32 %v1738, %v1734
    %1740 = vadd.xlane.f32.xlu0 %v1739
    %v1741 = vpop.xlane.xlu0 %1740
    %v1742 = vmul.f32 %v1729, %v1729
    %v1743 = vmul.f32 %v1730, %v1730
    %v1744 = vmul.f32 %v1731, %v1731
    %v1745 = vmul.f32 %v1732, %v1732
    %v1746 = vmul.f32 %v1733, %v1733
    %v1747 = vmul.f32 %v1734, %v1734
    %v1748 = vadd.f32 %v1742, %v1743
    %v1749 = vadd.f32 %v1748, %v1744
    %v1750 = vadd.f32 %v1749, %v1745
    %v1751 = vadd.f32 %v1750, %v1746
    %v1752 = vadd.f32 %v1751, %v1747
    %1753 = vadd.xlane.f32.xlu0 %v1752
    %v1754 = vpop.xlane.xlu0 %1753
    %v1755 = vmul.f32 %v1741, 0.001953125
    %v1756 = vmul.f32 %v1754, 0.001953125
    %v1757 = vmul.f32 %v1755, %v1755
    %v1758 = vsub.f32 %v1756, %v1757
    %v1759 = vadd.f32 %v1758, 1e-05
    %v1760 = vrsqrt.pop %v1759
    %v1761 = vmul.f32 %v1727, %v1760
    %v1762 = vmul.f32 %v1755, %v1761
    %v1763 = vsub.f32 %v1728, %v1762
    %1765 = vset.pattern.permute.xlu0 0
    %1766 = vperm.xlu0 %1765, %v1761
    %v1767 = vpop.permute.xlu0 %1766
    %v1769 = vmul.f32 %v1581, %v1767
    %v1770 = vmul.f32 %v1583, %v1767
    %v1771 = vmul.f32 %v1652, %v1767
    %v1772 = vmul.f32 %v1654, %v1767
    %v1773 = vmul.f32 %v1723, %v1767
    %v1774 = vmul.f32 %v1725, %v1767
    %1776 = vset.pattern.permute.xlu0 0
    %1777 = vperm.xlu0 %1776, %v1763
    %v1778 = vpop.permute.xlu0 %1777
    %v1780 = vadd.f32 %v1769, %v1778
    %v1781 = vadd.f32 %v1770, %v1778
    %v1782 = vadd.f32 %v1771, %v1778
    %v1783 = vadd.f32 %v1772, %v1778
    %v1784 = vadd.f32 %v1773, %v1778
    %v1785 = vadd.f32 %v1774, %v1778
    %v1786 = vadd.f32 %v1497, %v1780
    %v1787 = vadd.f32 %v1498, %v1781
    %v1788 = vadd.f32 %v1499, %v1782
    %v1789 = vadd.f32 %v1500, %v1783
    %v1790 = vadd.f32 %v1501, %v1784
    %v1791 = vadd.f32 %v1502, %v1785
    %v1792 = vmax.f32 %v1786, 0.0
    %v1793 = vmax.f32 %v1787, 0.0
    %v1794 = vmax.f32 %v1788, 0.0
    %v1795 = vmax.f32 %v1789, 0.0
    %v1796 = vmax.f32 %v1790, 0.0
    %v1797 = vmax.f32 %v1791, 0.0
    %1798 = vst [vmem:[#allocation6] sm:$0xff] %v1792
    %1799 = vst [vmem:[#allocation6 + $0x8] sm:$0xff] %v1793
    %1800 = vst [vmem:[#allocation6 + $0x10] sm:$0xff] %v1794
    %1801 = vst [vmem:[#allocation6 + $0x18] sm:$0xff] %v1795
    %1802 = vst [vmem:[#allocation6 + $0x20] sm:$0xff] %v1796
    %1803 = vst [vmem:[#allocation6 + $0x28] sm:$0xff] %v1797
    // Predicated region
    $region50: #{tpu_custom_call.1} parent=1 // pred_check
      _
    $region51: #{tpu_custom_call.1} parent=1 // pred_check_branch
      %1805 = sbr.rel (0) target = $region53
    $region52: #{tpu_custom_call.1} parent=1 // pred_region
      %s1807 = ssub.s32 768, 768
      %1808 = vsyncadd [#allocation5], %s1807
      %s1810 = sshll.u32 [#allocation6], 4
      %s1811 = int_to_ptr.vmem [resolvable:$true] %s1810
      %1813 = dma.vmem_to_hbm [thread:$0]  %s1811, 768, %s11, [#allocation5]
    $region53: #{tpu_custom_call.1} parent=1 // pred_fallthru
      _
    // Predicated region
    $region54: #{tpu_custom_call.1} parent=1 // pred_check
      _
    $region55: #{tpu_custom_call.1} parent=1 // pred_check_branch
      %1815 = sbr.rel (0) target = $region57
    $region56: #{tpu_custom_call.1} parent=1 // pred_region
      %1816 = dma.done [#allocation5], 768
    $region57: #{tpu_custom_call.1} parent=1 // pred_fallthru
      _
    %1817 = vsyncpa [#allocation4], 1
    %1818 = vsyncpa [#allocation5], 1

</llo_original>
